<compile_context>
chip_gen: v6e
topology: v6e:2x2x1
jax: 0.10.0
libtpu: 0.0.40
codegen_flags: <defaults>
</compile_context>

<pallas_src>
import functools

import jax
import jax.numpy as jnp
from jax.experimental import pallas as pl
from jax.experimental.pallas import tpu as pltpu

IN_FEATS = 37
OUT_FEATS = 12
IN_PAD = 128    # lane-aligned padded input width
OUT_PAD = 128   # lane-aligned padded output width
H1, H2, H3 = 256, 256, 128


def _elu(x):
    # torch.nn.ELU(alpha=1.0): x if x > 0 else exp(x) - 1   (f32 on VPU/EUP)
    return jnp.where(x > 0, x, jnp.exp(x) - 1.0)


def mlp_kernel(x_ref,
               w1_ref, b1_ref,
               w2_ref, b2_ref,
               w3_ref, b3_ref,
               w4_ref, b4_ref,
               o_ref):
    # x tile: (TB, IN_PAD) bf16.  Weights arrive in bf16; all matmuls accumulate in
    # f32 on the MXU, the bias/ELU epilogue stays in f32, re-cast to bf16 only at the
    # next MXU input.
    h = x_ref[...]

    h = jnp.dot(h, w1_ref[...], preferred_element_type=jnp.float32) + b1_ref[...]
    h = _elu(h)

    h = jnp.dot(h.astype(jnp.bfloat16), w2_ref[...],
                preferred_element_type=jnp.float32) + b2_ref[...]
    h = _elu(h)

    h = jnp.dot(h.astype(jnp.bfloat16), w3_ref[...],
                preferred_element_type=jnp.float32) + b3_ref[...]
    h = _elu(h)

    h = jnp.dot(h.astype(jnp.bfloat16), w4_ref[...],
                preferred_element_type=jnp.float32) + b4_ref[...]

    o_ref[...] = h  # (TB, OUT_PAD) f32, lane-dense store


@functools.partial(jax.jit, static_argnames=("tb",))
def mymodel_forward(x, params, *, tb=256):
    """x: (B, 37) float32. params: w1..w4 as (in, out) f32, b1..b4 as (1, out) f32."""
    B = x.shape[0]
    b_pad = ((B + tb - 1) // tb) * tb

    # --- lane/sublane padding + bf16 casts (cheap, fused by XLA) --------------------
    x_p = (jnp.zeros((b_pad, IN_PAD), jnp.float32)
           .at[:B, :IN_FEATS].set(x)
           .astype(jnp.bfloat16))

    w1 = (jnp.zeros((IN_PAD, H1), jnp.float32)
          .at[:IN_FEATS, :].set(params["w1"]).astype(jnp.bfloat16))
    w2 = params["w2"].astype(jnp.bfloat16)
    w3 = params["w3"].astype(jnp.bfloat16)
    w4 = (jnp.zeros((H3, OUT_PAD), jnp.float32)
          .at[:, :OUT_FEATS].set(params["w4"]).astype(jnp.bfloat16))

    b1 = params["b1"]
    b2 = params["b2"]
    b3 = params["b3"]
    b4 = jnp.zeros((1, OUT_PAD), jnp.float32).at[:, :OUT_FEATS].set(params["b4"])

    # --- batch-tiled grid; weights/biases resident via constant index_map -----------
    def resident(shape):
        return pl.BlockSpec(shape, lambda i: (0, 0))

    out_padded = pl.pallas_call(
        mlp_kernel,
        out_shape=jax.ShapeDtypeStruct((b_pad, OUT_PAD), jnp.float32),
        grid_spec=pltpu.PrefetchScalarGridSpec(
            num_scalar_prefetch=0,
            grid=(b_pad // tb,),
            in_specs=[
                pl.BlockSpec((tb, IN_PAD), lambda i: (i, 0)),    # x tile (pipelined)
                resident((IN_PAD, H1)), resident((1, H1)),
                resident((H1, H2)),     resident((1, H2)),
                resident((H2, H3)),     resident((1, H3)),
                resident((H3, OUT_PAD)), resident((1, OUT_PAD)),
            ],
            out_specs=pl.BlockSpec((tb, OUT_PAD), lambda i: (i, 0)),
        ),
        compiler_params=pltpu.CompilerParams(
            dimension_semantics=("parallel",),   # megacore sharding on v7x
        ),
    )(x_p, w1, b1, w2, b2, w3, b3, w4, b4)

    return out_padded[:B, :OUT_FEATS]


def init_params(key):
    """Deterministic init mimicking torch.nn.Linear default (uniform +-1/sqrt(fan_in)).
    Weights stored as (in_features, out_features); biases as (1, out_features)."""
    dims = [(IN_FEATS, H1), (H1, H2), (H2, H3), (H3, OUT_FEATS)]
    params = {}
    for i, (fan_in, fan_out) in enumerate(dims, start=1):
        key, kw, kb = jax.random.split(key, 3)
        bound = 1.0 / jnp.sqrt(jnp.float32(fan_in))
        params[f"w{i}"] = jax.random.uniform(
            kw, (fan_in, fan_out), jnp.float32, -bound, bound)
        params[f"b{i}"] = jax.random.uniform(
            kb, (1, fan_out), jnp.float32, -bound, bound)
    return params


def _reference_forward(x, params):
    """Pure-JAX f32 reference of the PyTorch module."""
    h = x
    for i in range(1, 4):
        h = h @ params[f"w{i}"] + params[f"b{i}"]
        h = jnp.where(h > 0, h, jnp.exp(h) - 1.0)
    return h @ params["w4"] + params["b4"]


if __name__ == "__main__":
    key = jax.random.PRNGKey(0)
    key, kx = jax.random.split(key)

    # Small but grid-exercising batch: 300 rows -> padded to 512 -> 2 grid steps of TB=256.
    B = 300
    x = jax.random.normal(kx, (B, IN_FEATS), jnp.float32)

    params = init_params(key)

    out = mymodel_forward(x, params)
    out = jax.block_until_ready(out)

    # Sanity check against the f32 reference (kernel uses bf16 MXU operands with
    # f32 accumulation, so allow bf16-level tolerance).
    ref = _reference_forward(x, params)
    assert out.shape == (B, OUT_FEATS)
    assert jnp.allclose(out, ref, atol=5e-2, rtol=5e-2), (
        float(jnp.max(jnp.abs(out - ref))))

    print("KERNEL_OK")
</pallas_src>

<mosaic_0001>
module attributes {stable_mosaic.version = 11 : i64} {
  func.func @mlp_kernel(%arg0: i32, %arg1: memref<256x128xbf16, #tpu.memory_space<vmem>>, %arg2: memref<128x256xbf16, #tpu.memory_space<vmem>>, %arg3: memref<1x256xf32, #tpu.memory_space<vmem>>, %arg4: memref<256x256xbf16, #tpu.memory_space<vmem>>, %arg5: memref<1x256xf32, #tpu.memory_space<vmem>>, %arg6: memref<256x128xbf16, #tpu.memory_space<vmem>>, %arg7: memref<1x128xf32, #tpu.memory_space<vmem>>, %arg8: memref<128x128xbf16, #tpu.memory_space<vmem>>, %arg9: memref<1x128xf32, #tpu.memory_space<vmem>>, %arg10: memref<256x128xf32, #tpu.memory_space<vmem>>) attributes {dimension_semantics = [#tpu.dimension_semantics<parallel>], iteration_bounds = array<i64: 2>, scalar_prefetch = 0 : i64, scratch_operands = 0 : i64, tpu.core_type = #tpu.core_type<tc>, window_params = [{transform_indices = @transform_0, window_bounds = array<i64: 256, 128>}, {pipeline_mode = #tpu.pipeline_mode<synchronous>, transform_indices = @transform_1, window_bounds = array<i64: 128, 256>}, {pipeline_mode = #tpu.pipeline_mode<synchronous>, transform_indices = @transform_2, window_bounds = array<i64: 1, 256>}, {pipeline_mode = #tpu.pipeline_mode<synchronous>, transform_indices = @transform_3, window_bounds = array<i64: 256, 256>}, {pipeline_mode = #tpu.pipeline_mode<synchronous>, transform_indices = @transform_4, window_bounds = array<i64: 1, 256>}, {pipeline_mode = #tpu.pipeline_mode<synchronous>, transform_indices = @transform_5, window_bounds = array<i64: 256, 128>}, {pipeline_mode = #tpu.pipeline_mode<synchronous>, transform_indices = @transform_6, window_bounds = array<i64: 1, 128>}, {pipeline_mode = #tpu.pipeline_mode<synchronous>, transform_indices = @transform_7, window_bounds = array<i64: 128, 128>}, {pipeline_mode = #tpu.pipeline_mode<synchronous>, transform_indices = @transform_8, window_bounds = array<i64: 1, 128>}, {transform_indices = @transform_9, window_bounds = array<i64: 256, 128>}]} {
    %c0 = arith.constant 0 : index
    %c0_0 = arith.constant 0 : index
    %0 = vector.load %arg1[%c0, %c0_0] : memref<256x128xbf16, #tpu.memory_space<vmem>>, vector<256x128xbf16>
    %c0_1 = arith.constant 0 : index
    %c0_2 = arith.constant 0 : index
    %1 = vector.load %arg2[%c0_1, %c0_2] : memref<128x256xbf16, #tpu.memory_space<vmem>>, vector<128x256xbf16>
    %cst = arith.constant dense<0.000000e+00> : vector<256x256xf32>
    %2 = tpu.matmul %0, %1, %cst {dimension_numbers = #tpu.dot_dimension_numbers<[1], [0], [0], [1], [0, 0, 1, 1], [], []>} : vector<256x128xbf16>, vector<128x256xbf16>, vector<256x256xf32> -> vector<256x256xf32>
    %c0_3 = arith.constant 0 : index
    %c0_4 = arith.constant 0 : index
    %3 = vector.load %arg3[%c0_3, %c0_4] : memref<1x256xf32, #tpu.memory_space<vmem>>, vector<1x256xf32>
    %4 = vector.broadcast %3 : vector<1x256xf32> to vector<256x256xf32>
    %5 = arith.addf %2, %4 : vector<256x256xf32>
    %cst_5 = arith.constant 0.000000e+00 : f32
    %6 = vector.broadcast %cst_5 : f32 to vector<256x256xf32>
    %7 = arith.cmpf ogt, %5, %6 : vector<256x256xf32>
    %8 = math.exp %5 : vector<256x256xf32>
    %cst_6 = arith.constant 1.000000e+00 : f32
    %9 = vector.broadcast %cst_6 : f32 to vector<256x256xf32>
    %10 = arith.subf %8, %9 : vector<256x256xf32>
    %11 = arith.select %7, %5, %10 : vector<256x256xi1>, vector<256x256xf32>
    %12 = arith.truncf %11 : vector<256x256xf32> to vector<256x256xbf16>
    %c0_7 = arith.constant 0 : index
    %c0_8 = arith.constant 0 : index
    %13 = vector.load %arg4[%c0_7, %c0_8] : memref<256x256xbf16, #tpu.memory_space<vmem>>, vector<256x256xbf16>
    %cst_9 = arith.constant dense<0.000000e+00> : vector<256x256xf32>
    %14 = tpu.matmul %12, %13, %cst_9 {dimension_numbers = #tpu.dot_dimension_numbers<[1], [0], [0], [1], [0, 0, 1, 1], [], []>} : vector<256x256xbf16>, vector<256x256xbf16>, vector<256x256xf32> -> vector<256x256xf32>
    %c0_10 = arith.constant 0 : index
    %c0_11 = arith.constant 0 : index
    %15 = vector.load %arg5[%c0_10, %c0_11] : memref<1x256xf32, #tpu.memory_space<vmem>>, vector<1x256xf32>
    %16 = vector.broadcast %15 : vector<1x256xf32> to vector<256x256xf32>
    %17 = arith.addf %14, %16 : vector<256x256xf32>
    %cst_12 = arith.constant 0.000000e+00 : f32
    %18 = vector.broadcast %cst_12 : f32 to vector<256x256xf32>
    %19 = arith.cmpf ogt, %17, %18 : vector<256x256xf32>
    %20 = math.exp %17 : vector<256x256xf32>
    %cst_13 = arith.constant 1.000000e+00 : f32
    %21 = vector.broadcast %cst_13 : f32 to vector<256x256xf32>
    %22 = arith.subf %20, %21 : vector<256x256xf32>
    %23 = arith.select %19, %17, %22 : vector<256x256xi1>, vector<256x256xf32>
    %24 = arith.truncf %23 : vector<256x256xf32> to vector<256x256xbf16>
    %c0_14 = arith.constant 0 : index
    %c0_15 = arith.constant 0 : index
    %25 = vector.load %arg6[%c0_14, %c0_15] : memref<256x128xbf16, #tpu.memory_space<vmem>>, vector<256x128xbf16>
    %cst_16 = arith.constant dense<0.000000e+00> : vector<256x128xf32>
    %26 = tpu.matmul %24, %25, %cst_16 {dimension_numbers = #tpu.dot_dimension_numbers<[1], [0], [0], [1], [0, 0, 1, 1], [], []>} : vector<256x256xbf16>, vector<256x128xbf16>, vector<256x128xf32> -> vector<256x128xf32>
    %c0_17 = arith.constant 0 : index
    %c0_18 = arith.constant 0 : index
    %27 = vector.load %arg7[%c0_17, %c0_18] : memref<1x128xf32, #tpu.memory_space<vmem>>, vector<1x128xf32>
    %28 = vector.broadcast %27 : vector<1x128xf32> to vector<256x128xf32>
    %29 = arith.addf %26, %28 : vector<256x128xf32>
    %cst_19 = arith.constant 0.000000e+00 : f32
    %30 = vector.broadcast %cst_19 : f32 to vector<256x128xf32>
    %31 = arith.cmpf ogt, %29, %30 : vector<256x128xf32>
    %32 = math.exp %29 : vector<256x128xf32>
    %cst_20 = arith.constant 1.000000e+00 : f32
    %33 = vector.broadcast %cst_20 : f32 to vector<256x128xf32>
    %34 = arith.subf %32, %33 : vector<256x128xf32>
    %35 = arith.select %31, %29, %34 : vector<256x128xi1>, vector<256x128xf32>
    %36 = arith.truncf %35 : vector<256x128xf32> to vector<256x128xbf16>
    %c0_21 = arith.constant 0 : index
    %c0_22 = arith.constant 0 : index
    %37 = vector.load %arg8[%c0_21, %c0_22] : memref<128x128xbf16, #tpu.memory_space<vmem>>, vector<128x128xbf16>
    %cst_23 = arith.constant dense<0.000000e+00> : vector<256x128xf32>
    %38 = tpu.matmul %36, %37, %cst_23 {dimension_numbers = #tpu.dot_dimension_numbers<[1], [0], [0], [1], [0, 0, 1, 1], [], []>} : vector<256x128xbf16>, vector<128x128xbf16>, vector<256x128xf32> -> vector<256x128xf32>
    %c0_24 = arith.constant 0 : index
    %c0_25 = arith.constant 0 : index
    %39 = vector.load %arg9[%c0_24, %c0_25] : memref<1x128xf32, #tpu.memory_space<vmem>>, vector<1x128xf32>
    %40 = vector.broadcast %39 : vector<1x128xf32> to vector<256x128xf32>
    %41 = arith.addf %38, %40 : vector<256x128xf32>
    %c0_26 = arith.constant 0 : index
    %c0_27 = arith.constant 0 : index
    %42 = vector.load %arg10[%c0_26, %c0_27] : memref<256x128xf32, #tpu.memory_space<vmem>>, vector<256x128xf32>
    tpu.vector_store %arg10[%c0_26, %c0_27], %41 {strides = array<i32>} : memref<256x128xf32, #tpu.memory_space<vmem>>, vector<256x128xf32>,
    return
  }
  func.func @transform_0(%arg0: i32) -> (i32, i32) {
    %c0_i32 = arith.constant 0 : i32
    %c0_i32_0 = arith.constant 0 : i32
    return %arg0, %c0_i32 : i32, i32
  }
  func.func @transform_1(%arg0: i32) -> (i32, i32) {
    %c0_i32 = arith.constant 0 : i32
    %c0_i32_0 = arith.constant 0 : i32
    %c0_i32_1 = arith.constant 0 : i32
    return %c0_i32, %c0_i32_0 : i32, i32
  }
  func.func @transform_2(%arg0: i32) -> (i32, i32) {
    %c0_i32 = arith.constant 0 : i32
    %c0_i32_0 = arith.constant 0 : i32
    %c0_i32_1 = arith.constant 0 : i32
    return %c0_i32, %c0_i32_0 : i32, i32
  }
  func.func @transform_3(%arg0: i32) -> (i32, i32) {
    %c0_i32 = arith.constant 0 : i32
    %c0_i32_0 = arith.constant 0 : i32
    %c0_i32_1 = arith.constant 0 : i32
    return %c0_i32, %c0_i32_0 : i32, i32
  }
  func.func @transform_4(%arg0: i32) -> (i32, i32) {
    %c0_i32 = arith.constant 0 : i32
    %c0_i32_0 = arith.constant 0 : i32
    %c0_i32_1 = arith.constant 0 : i32
    return %c0_i32, %c0_i32_0 : i32, i32
  }
  func.func @transform_5(%arg0: i32) -> (i32, i32) {
    %c0_i32 = arith.constant 0 : i32
    %c0_i32_0 = arith.constant 0 : i32
    %c0_i32_1 = arith.constant 0 : i32
    return %c0_i32, %c0_i32_0 : i32, i32
  }
  func.func @transform_6(%arg0: i32) -> (i32, i32) {
    %c0_i32 = arith.constant 0 : i32
    %c0_i32_0 = arith.constant 0 : i32
    %c0_i32_1 = arith.constant 0 : i32
    return %c0_i32, %c0_i32_0 : i32, i32
  }
  func.func @transform_7(%arg0: i32) -> (i32, i32) {
    %c0_i32 = arith.constant 0 : i32
    %c0_i32_0 = arith.constant 0 : i32
    %c0_i32_1 = arith.constant 0 : i32
    return %c0_i32, %c0_i32_0 : i32, i32
  }
  func.func @transform_8(%arg0: i32) -> (i32, i32) {
    %c0_i32 = arith.constant 0 : i32
    %c0_i32_0 = arith.constant 0 : i32
    %c0_i32_1 = arith.constant 0 : i32
    return %c0_i32, %c0_i32_0 : i32, i32
  }
  func.func @transform_9(%arg0: i32) -> (i32, i32) {
    %c0_i32 = arith.constant 0 : i32
    %c0_i32_0 = arith.constant 0 : i32
    return %arg0, %c0_i32 : i32, i32
  }
}

</mosaic_0001>

<llo_original>
// kernel: mymodel_forward.1
$region0: #{mymodel_forward.1}
  #allocation0 [shape = 'u32[]', space=smem, size = 0x4, offset = 0x4, fixed_abs, tag = 'smem constant byte address 0x4 - core index']
  #allocation1 [shape = 'u32[144,128]{1,0:T(1,128)}', space=vmem, size = 0x12000, scoped, tag = 'internal scratch']
  %s0 = inlined_call_operand.vmem [shape: bf16[512,128], index: 0, kind: input, shape index: {}]
  %s1 = inlined_call_operand.vmem [shape: bf16[128,256], index: 1, kind: input, shape index: {}]
  %s2 = inlined_call_operand.vmem [shape: f32[1,256], index: 2, kind: input, shape index: {}]
  %s3 = inlined_call_operand.vmem [shape: bf16[256,256], index: 3, kind: input, shape index: {}]
  %s4 = inlined_call_operand.vmem [shape: f32[1,256], index: 4, kind: input, shape index: {}]
  %s5 = inlined_call_operand.vmem [shape: bf16[256,128], index: 5, kind: input, shape index: {}]
  %s6 = inlined_call_operand.vmem [shape: f32[1,128], index: 6, kind: input, shape index: {}]
  %s7 = inlined_call_operand.vmem [shape: bf16[128,128], index: 7, kind: input, shape index: {}]
  %s8 = inlined_call_operand.vmem [shape: f32[1,128], index: 8, kind: input, shape index: {}]
  %s9 = inlined_call_operand.vmem [shape: f32[512,128], index: 9, kind: output, shape index: {}]
  %s10 = sld [smem:[#allocation0]]
  $region69: #{mymodel_forward.1} parent=0
    _
  %s12 = ssub.s32 1, %s10
  %s13 = scalar_select 0, %s12, %s10
  loop: start=0, step=1, limit=4
  $region2: #{mymodel_forward.1} parent=0 // loop_pre_header
    _
  $region3: #{mymodel_forward.1} parent=0 // loop_header
    %s15 = sphi 0, %s19
    %p16 = scmp.ge.s32.totalorder %s15, 4
    %s25 = sphi 0, %s27
    %s28 = sphi 0, %s25
    %s29 = sphi 0, %s28
    %s45 = sphi 0, %s29
    %s49 = sphi 0, %s49
    %s51 = sphi 0, %s49
    %s52 = sphi 0, %s51
    %s66 = sphi 0, %s52
    %s70 = sphi 0, %s70
    %s72 = sphi 0, %s70
    %s73 = sphi 0, %s72
    %s87 = sphi 0, %s73
    %s91 = sphi 0, %s91
    %s93 = sphi 0, %s91
    %s94 = sphi 0, %s93
    %s108 = sphi 0, %s94
    %s112 = sphi 0, %s112
    %s114 = sphi 0, %s112
    %s115 = sphi 0, %s114
    %s129 = sphi 0, %s115
    %s133 = sphi 0, %s133
    %s135 = sphi 0, %s133
    %s136 = sphi 0, %s135
    %s150 = sphi 0, %s136
    %s154 = sphi 0, %s154
    %s156 = sphi 0, %s154
    %s157 = sphi 0, %s156
    %s171 = sphi 0, %s157
    %s175 = sphi 0, %s175
    %s177 = sphi 0, %s175
    %s178 = sphi 0, %s177
    %s192 = sphi 0, %s178
    %s196 = sphi 0, %s196
    %s198 = sphi 0, %s196
    %s199 = sphi 0, %s198
    %s213 = sphi 0, %s199
    %s219 = sphi 0, %s221
    %s222 = sphi 0, %s219
    %s223 = sphi 0, %s222
    %s239 = sphi 0, %s223
  $region4: #{mymodel_forward.1} parent=0 // loop_header_branch
    %18 = sbr.rel (%p16) target = $region8
  $region5: #{mymodel_forward.1} parent=0 // loop_body
    %s20 = ssub.s32 %s15, 1
    %s21 = ssub.s32 %s15, 2
    %s22 = sadd.s32 %s15, 1
    %s23 = ssub.s32 %s15, %s22
    %p24 = scmp.eq.s32.totalorder %s23, 0
    %s26 = sadd.s32 %s25, 1
    %s27 = scalar_select %p24, %s25, %s26
    %p30 = pneg %p24
    %p31 = scmp.eq.s32.totalorder %s15, 1
    %p32 = por %p30, %p31
    %p33 = scmp.ne.s32.totalorder %s25, %s28
    %p34 = scmp.eq.s32.totalorder %s15, 0
    %p35 = por %p33, %p34
    %p36 = scmp.ne.s32.totalorder %s25, %s28
    %p37 = scmp.eq.s32.totalorder %s20, 1
    %p38 = por %p36, %p37
    %p39 = scmp.ne.s32.totalorder %s28, %s29
    %p40 = scmp.eq.s32.totalorder %s20, 0
    %p41 = por %p39, %p40
    %p42 = scmp.ne.s32.totalorder %s28, %s29
    %p43 = scmp.eq.s32.totalorder %s21, 1
    %p44 = por %p42, %p43
    %p46 = scmp.ne.s32.totalorder %s29, %s45
    %p47 = scmp.eq.s32.totalorder %s21, 0
    %p48 = por %p46, %p47
    %s50 = sadd.s32 %s49, 1
    %p53 = scmp.eq.s32.totalorder %s15, 1
    %p54 = scmp.ne.s32.totalorder %s49, %s51
    %p55 = scmp.eq.s32.totalorder %s15, 0
    %p56 = por %p54, %p55
    %p57 = scmp.ne.s32.totalorder %s49, %s51
    %p58 = scmp.eq.s32.totalorder %s20, 1
    %p59 = por %p57, %p58
    %p60 = scmp.ne.s32.totalorder %s51, %s52
    %p61 = scmp.eq.s32.totalorder %s20, 0
    %p62 = por %p60, %p61
    %p63 = scmp.ne.s32.totalorder %s51, %s52
    %p64 = scmp.eq.s32.totalorder %s21, 1
    %p65 = por %p63, %p64
    %p67 = scmp.ne.s32.totalorder %s52, %s66
    %p68 = scmp.eq.s32.totalorder %s21, 0
    %p69 = por %p67, %p68
    %s71 = sadd.s32 %s70, 1
    %p74 = scmp.eq.s32.totalorder %s15, 1
    %p75 = scmp.ne.s32.totalorder %s70, %s72
    %p76 = scmp.eq.s32.totalorder %s15, 0
    %p77 = por %p75, %p76
    %p78 = scmp.ne.s32.totalorder %s70, %s72
    %p79 = scmp.eq.s32.totalorder %s20, 1
    %p80 = por %p78, %p79
    %p81 = scmp.ne.s32.totalorder %s72, %s73
    %p82 = scmp.eq.s32.totalorder %s20, 0
    %p83 = por %p81, %p82
    %p84 = scmp.ne.s32.totalorder %s72, %s73
    %p85 = scmp.eq.s32.totalorder %s21, 1
    %p86 = por %p84, %p85
    %p88 = scmp.ne.s32.totalorder %s73, %s87
    %p89 = scmp.eq.s32.totalorder %s21, 0
    %p90 = por %p88, %p89
    %s92 = sadd.s32 %s91, 1
    %p95 = scmp.eq.s32.totalorder %s15, 1
    %p96 = scmp.ne.s32.totalorder %s91, %s93
    %p97 = scmp.eq.s32.totalorder %s15, 0
    %p98 = por %p96, %p97
    %p99 = scmp.ne.s32.totalorder %s91, %s93
    %p100 = scmp.eq.s32.totalorder %s20, 1
    %p101 = por %p99, %p100
    %p102 = scmp.ne.s32.totalorder %s93, %s94
    %p103 = scmp.eq.s32.totalorder %s20, 0
    %p104 = por %p102, %p103
    %p105 = scmp.ne.s32.totalorder %s93, %s94
    %p106 = scmp.eq.s32.totalorder %s21, 1
    %p107 = por %p105, %p106
    %p109 = scmp.ne.s32.totalorder %s94, %s108
    %p110 = scmp.eq.s32.totalorder %s21, 0
    %p111 = por %p109, %p110
    %s113 = sadd.s32 %s112, 1
    %p116 = scmp.eq.s32.totalorder %s15, 1
    %p117 = scmp.ne.s32.totalorder %s112, %s114
    %p118 = scmp.eq.s32.totalorder %s15, 0
    %p119 = por %p117, %p118
    %p120 = scmp.ne.s32.totalorder %s112, %s114
    %p121 = scmp.eq.s32.totalorder %s20, 1
    %p122 = por %p120, %p121
    %p123 = scmp.ne.s32.totalorder %s114, %s115
    %p124 = scmp.eq.s32.totalorder %s20, 0
    %p125 = por %p123, %p124
    %p126 = scmp.ne.s32.totalorder %s114, %s115
    %p127 = scmp.eq.s32.totalorder %s21, 1
    %p128 = por %p126, %p127
    %p130 = scmp.ne.s32.totalorder %s115, %s129
    %p131 = scmp.eq.s32.totalorder %s21, 0
    %p132 = por %p130, %p131
    %s134 = sadd.s32 %s133, 1
    %p137 = scmp.eq.s32.totalorder %s15, 1
    %p138 = scmp.ne.s32.totalorder %s133, %s135
    %p139 = scmp.eq.s32.totalorder %s15, 0
    %p140 = por %p138, %p139
    %p141 = scmp.ne.s32.totalorder %s133, %s135
    %p142 = scmp.eq.s32.totalorder %s20, 1
    %p143 = por %p141, %p142
    %p144 = scmp.ne.s32.totalorder %s135, %s136
    %p145 = scmp.eq.s32.totalorder %s20, 0
    %p146 = por %p144, %p145
    %p147 = scmp.ne.s32.totalorder %s135, %s136
    %p148 = scmp.eq.s32.totalorder %s21, 1
    %p149 = por %p147, %p148
    %p151 = scmp.ne.s32.totalorder %s136, %s150
    %p152 = scmp.eq.s32.totalorder %s21, 0
    %p153 = por %p151, %p152
    %s155 = sadd.s32 %s154, 1
    %p158 = scmp.eq.s32.totalorder %s15, 1
    %p159 = scmp.ne.s32.totalorder %s154, %s156
    %p160 = scmp.eq.s32.totalorder %s15, 0
    %p161 = por %p159, %p160
    %p162 = scmp.ne.s32.totalorder %s154, %s156
    %p163 = scmp.eq.s32.totalorder %s20, 1
    %p164 = por %p162, %p163
    %p165 = scmp.ne.s32.totalorder %s156, %s157
    %p166 = scmp.eq.s32.totalorder %s20, 0
    %p167 = por %p165, %p166
    %p168 = scmp.ne.s32.totalorder %s156, %s157
    %p169 = scmp.eq.s32.totalorder %s21, 1
    %p170 = por %p168, %p169
    %p172 = scmp.ne.s32.totalorder %s157, %s171
    %p173 = scmp.eq.s32.totalorder %s21, 0
    %p174 = por %p172, %p173
    %s176 = sadd.s32 %s175, 1
    %p179 = scmp.eq.s32.totalorder %s15, 1
    %p180 = scmp.ne.s32.totalorder %s175, %s177
    %p181 = scmp.eq.s32.totalorder %s15, 0
    %p182 = por %p180, %p181
    %p183 = scmp.ne.s32.totalorder %s175, %s177
    %p184 = scmp.eq.s32.totalorder %s20, 1
    %p185 = por %p183, %p184
    %p186 = scmp.ne.s32.totalorder %s177, %s178
    %p187 = scmp.eq.s32.totalorder %s20, 0
    %p188 = por %p186, %p187
    %p189 = scmp.ne.s32.totalorder %s177, %s178
    %p190 = scmp.eq.s32.totalorder %s21, 1
    %p191 = por %p189, %p190
    %p193 = scmp.ne.s32.totalorder %s178, %s192
    %p194 = scmp.eq.s32.totalorder %s21, 0
    %p195 = por %p193, %p194
    %s197 = sadd.s32 %s196, 1
    %p200 = scmp.eq.s32.totalorder %s15, 1
    %p201 = scmp.ne.s32.totalorder %s196, %s198
    %p202 = scmp.eq.s32.totalorder %s15, 0
    %p203 = por %p201, %p202
    %p204 = scmp.ne.s32.totalorder %s196, %s198
    %p205 = scmp.eq.s32.totalorder %s20, 1
    %p206 = por %p204, %p205
    %p207 = scmp.ne.s32.totalorder %s198, %s199
    %p208 = scmp.eq.s32.totalorder %s20, 0
    %p209 = por %p207, %p208
    %p210 = scmp.ne.s32.totalorder %s198, %s199
    %p211 = scmp.eq.s32.totalorder %s21, 1
    %p212 = por %p210, %p211
    %p214 = scmp.ne.s32.totalorder %s199, %s213
    %p215 = scmp.eq.s32.totalorder %s21, 0
    %p216 = por %p214, %p215
    %s217 = ssub.s32 %s15, %s22
    %p218 = scmp.eq.s32.totalorder %s217, 0
    %s220 = sadd.s32 %s219, 1
    %s221 = scalar_select %p218, %s219, %s220
    %p224 = pneg %p218
    %p225 = scmp.eq.s32.totalorder %s15, 1
    %p226 = por %p224, %p225
    %p227 = scmp.ne.s32.totalorder %s219, %s222
    %p228 = scmp.eq.s32.totalorder %s15, 0
    %p229 = por %p227, %p228
    %p230 = scmp.ne.s32.totalorder %s219, %s222
    %p231 = scmp.eq.s32.totalorder %s20, 1
    %p232 = por %p230, %p231
    %p233 = scmp.ne.s32.totalorder %s222, %s223
    %p234 = scmp.eq.s32.totalorder %s20, 0
    %p235 = por %p233, %p234
    %p236 = scmp.ne.s32.totalorder %s222, %s223
    %p237 = scmp.eq.s32.totalorder %s21, 1
    %p238 = por %p236, %p237
    %p240 = scmp.ne.s32.totalorder %s223, %s239
    %p241 = scmp.eq.s32.totalorder %s21, 0
    %p242 = por %p240, %p241
    %p243 = scmp.le.s32.totalorder 1, %s15
    %p244 = scmp.lt.s32.totalorder %s15, 3
    %p245 = pnand %p243, %p244
    %p246 = pneg %p245
    // Predicated region
    $region9: #{mymodel_forward.1} parent=5 // pred_check
      _
    $region10: #{mymodel_forward.1} parent=5 // pred_check_branch
      %248 = sbr.rel (%p245) target = $region12
    $region11: #{mymodel_forward.1} parent=5 // pred_region
      %s249 = ssub.s32 %s15, 1
      // Predicated region
      $region13: #{mymodel_forward.1} parent=11 // pred_check
        %p250 = pneg %p62
      $region14: #{mymodel_forward.1} parent=11 // pred_check_branch
        %252 = sbr.rel (%p250) target = $region16
      $region15: #{mymodel_forward.1} parent=11 // pred_region
        _
      $region16: #{mymodel_forward.1} parent=11 // pred_fallthru
        _
      // Predicated region
      $region17: #{mymodel_forward.1} parent=11 // pred_check
        %p253 = pneg %p83
      $region18: #{mymodel_forward.1} parent=11 // pred_check_branch
        %255 = sbr.rel (%p253) target = $region20
      $region19: #{mymodel_forward.1} parent=11 // pred_region
        _
      $region20: #{mymodel_forward.1} parent=11 // pred_fallthru
        _
      // Predicated region
      $region21: #{mymodel_forward.1} parent=11 // pred_check
        %p256 = pneg %p104
      $region22: #{mymodel_forward.1} parent=11 // pred_check_branch
        %258 = sbr.rel (%p256) target = $region24
      $region23: #{mymodel_forward.1} parent=11 // pred_region
        _
      $region24: #{mymodel_forward.1} parent=11 // pred_fallthru
        _
      // Predicated region
      $region25: #{mymodel_forward.1} parent=11 // pred_check
        %p259 = pneg %p125
      $region26: #{mymodel_forward.1} parent=11 // pred_check_branch
        %261 = sbr.rel (%p259) target = $region28
      $region27: #{mymodel_forward.1} parent=11 // pred_region
        _
      $region28: #{mymodel_forward.1} parent=11 // pred_fallthru
        _
      // Predicated region
      $region29: #{mymodel_forward.1} parent=11 // pred_check
        %p262 = pneg %p146
      $region30: #{mymodel_forward.1} parent=11 // pred_check_branch
        %264 = sbr.rel (%p262) target = $region32
      $region31: #{mymodel_forward.1} parent=11 // pred_region
        _
      $region32: #{mymodel_forward.1} parent=11 // pred_fallthru
        _
      // Predicated region
      $region33: #{mymodel_forward.1} parent=11 // pred_check
        %p265 = pneg %p167
      $region34: #{mymodel_forward.1} parent=11 // pred_check_branch
        %267 = sbr.rel (%p265) target = $region36
      $region35: #{mymodel_forward.1} parent=11 // pred_region
        _
      $region36: #{mymodel_forward.1} parent=11 // pred_fallthru
        _
      // Predicated region
      $region37: #{mymodel_forward.1} parent=11 // pred_check
        %p268 = pneg %p188
      $region38: #{mymodel_forward.1} parent=11 // pred_check_branch
        %270 = sbr.rel (%p268) target = $region40
      $region39: #{mymodel_forward.1} parent=11 // pred_region
        _
      $region40: #{mymodel_forward.1} parent=11 // pred_fallthru
        _
      // Predicated region
      $region41: #{mymodel_forward.1} parent=11 // pred_check
        %p271 = pneg %p209
      $region42: #{mymodel_forward.1} parent=11 // pred_check_branch
        %273 = sbr.rel (%p271) target = $region44
      $region43: #{mymodel_forward.1} parent=11 // pred_region
        _
      $region44: #{mymodel_forward.1} parent=11 // pred_fallthru
        _
    $region12: #{mymodel_forward.1} parent=5 // pred_fallthru
      _
    %p274 = scmp.lt.s32.totalorder %s15, 2
    // Predicated region
    $region45: #{mymodel_forward.1} parent=5 // pred_check
      %p275 = pneg %p274
    $region46: #{mymodel_forward.1} parent=5 // pred_check_branch
      %277 = sbr.rel (%p275) target = $region48
    $region47: #{mymodel_forward.1} parent=5 // pred_region
      // Predicated region
      $region49: #{mymodel_forward.1} parent=47 // pred_check
        %p278 = pneg %p35
      $region50: #{mymodel_forward.1} parent=47 // pred_check_branch
        %280 = sbr.rel (%p278) target = $region52
      $region51: #{mymodel_forward.1} parent=47 // pred_region
        %s281 = smul.u32 32, %s15
        %p282 = scmp.lt.s32.totalorder %s281, 63
        %s283 = scalar_select %p282, %s281, 63
        %s284 = smul.addr %s283, 4
        %s285 = scalar_lea.vmem %s0, %s284
        %s286 = smul.u32 32, %s15
      $region52: #{mymodel_forward.1} parent=47 // pred_fallthru
        _
    $region48: #{mymodel_forward.1} parent=5 // pred_fallthru
      _
    %p287 = scmp.le.s32.totalorder 1, %s15
    %p288 = scmp.lt.s32.totalorder %s15, 3
    %p289 = pnand %p287, %p288
    %p290 = pneg %p289
    // Predicated region
    $region53: #{mymodel_forward.1} parent=5 // pred_check
      _
    $region54: #{mymodel_forward.1} parent=5 // pred_check_branch
      %292 = sbr.rel (%p289) target = $region56
    $region55: #{mymodel_forward.1} parent=5 // pred_region
      %s293 = ssub.s32 %s15, 1
      %s294 = smul.u32 32, %s20
      %p295 = scmp.lt.s32.totalorder %s294, 63
      %s296 = scalar_select %p295, %s294, 63
      %s297 = smul.addr %s296, 4
      %s298 = scalar_lea.vmem %s0, %s297
      %p299 = pneg %p41
      %p300 = pneg %p38
      %p301 = pneg %p62
      %p302 = pneg %p59
      %p303 = pneg %p83
      %p304 = pneg %p80
      %p305 = pneg %p104
      %p306 = pneg %p101
      %p307 = pneg %p125
      %p308 = pneg %p122
      %p309 = pneg %p146
      %p310 = pneg %p143
      %p311 = pneg %p167
      %p312 = pneg %p164
      %p313 = pneg %p188
      %p314 = pneg %p185
      %p315 = pneg %p209
      %p316 = pneg %p206
      %p317 = pneg %p235
      %p318 = pneg %p232
      %s319 = smul.u32 32, %s20
      %p320 = scmp.lt.s32.totalorder %s319, 63
      %s321 = scalar_select %p320, %s319, 63
      %s322 = smul.addr %s321, 8
      %s323 = scalar_lea.vmem %s9, %s322
      %s324 = smul.u32 32, %s20
      %p325 = scmp.lt.s32.totalorder %s324, 63
      %s326 = scalar_select %p325, %s324, 63
      %s327 = smul.addr %s326, 4
      %s328 = scalar_lea.vmem %s0, %s327
      %s329 = smul.u32 32, %s20
      %s330 = smul.u32 32, %s20
      %p331 = scmp.lt.s32.totalorder %s330, 63
      %s332 = scalar_select %p331, %s330, 63
      %s333 = smul.addr %s332, 8
      %s334 = scalar_lea.vmem %s9, %s333
      %s335 = smul.u32 32, %s20
      %v337 = vld [vmem:[%s328] sm:$0xf]
      %v338 = vld [vmem:[%s328 + $0x4] sm:$0xf]
      %v339 = vld [vmem:[%s328 + $0x8] sm:$0xf]
      %v340 = vld [vmem:[%s328 + $0xc] sm:$0xf]
      %v341 = vld [vmem:[%s328 + $0x10] sm:$0xf]
      %v342 = vld [vmem:[%s328 + $0x14] sm:$0xf]
      %v343 = vld [vmem:[%s328 + $0x18] sm:$0xf]
      %v344 = vld [vmem:[%s328 + $0x1c] sm:$0xf]
      %v345 = vld [vmem:[%s328 + $0x20] sm:$0xf]
      %v346 = vld [vmem:[%s328 + $0x24] sm:$0xf]
      %v347 = vld [vmem:[%s328 + $0x28] sm:$0xf]
      %v348 = vld [vmem:[%s328 + $0x2c] sm:$0xf]
      %v349 = vld [vmem:[%s328 + $0x30] sm:$0xf]
      %v350 = vld [vmem:[%s328 + $0x34] sm:$0xf]
      %v351 = vld [vmem:[%s328 + $0x38] sm:$0xf]
      %v352 = vld [vmem:[%s328 + $0x3c] sm:$0xf]
      %v353 = vld [vmem:[%s328 + $0x40] sm:$0xf]
      %v354 = vld [vmem:[%s328 + $0x44] sm:$0xf]
      %v355 = vld [vmem:[%s328 + $0x48] sm:$0xf]
      %v356 = vld [vmem:[%s328 + $0x4c] sm:$0xf]
      %v357 = vld [vmem:[%s328 + $0x50] sm:$0xf]
      %v358 = vld [vmem:[%s328 + $0x54] sm:$0xf]
      %v359 = vld [vmem:[%s328 + $0x58] sm:$0xf]
      %v360 = vld [vmem:[%s328 + $0x5c] sm:$0xf]
      %v361 = vld [vmem:[%s328 + $0x60] sm:$0xf]
      %v362 = vld [vmem:[%s328 + $0x64] sm:$0xf]
      %v363 = vld [vmem:[%s328 + $0x68] sm:$0xf]
      %v364 = vld [vmem:[%s328 + $0x6c] sm:$0xf]
      %v365 = vld [vmem:[%s328 + $0x70] sm:$0xf]
      %v366 = vld [vmem:[%s328 + $0x74] sm:$0xf]
      %v367 = vld [vmem:[%s328 + $0x78] sm:$0xf]
      %v368 = vld [vmem:[%s328 + $0x7c] sm:$0xf]
      %v369 = vld [vmem:[%s1] sm:$0xff]
      %v370 = vld [vmem:[%s1 + $0x8] sm:$0xff]
      %v371 = vld [vmem:[%s1 + $0x10] sm:$0xff]
      %v372 = vld [vmem:[%s1 + $0x18] sm:$0xff]
      %v373 = vld [vmem:[%s1 + $0x20] sm:$0xff]
      %v374 = vld [vmem:[%s1 + $0x28] sm:$0xff]
      %v375 = vld [vmem:[%s1 + $0x30] sm:$0xff]
      %v376 = vld [vmem:[%s1 + $0x38] sm:$0xff]
      %v377 = vld [vmem:[%s1 + $0x40] sm:$0xff]
      %v378 = vld [vmem:[%s1 + $0x48] sm:$0xff]
      %v379 = vld [vmem:[%s1 + $0x50] sm:$0xff]
      %v380 = vld [vmem:[%s1 + $0x58] sm:$0xff]
      %v381 = vld [vmem:[%s1 + $0x60] sm:$0xff]
      %v382 = vld [vmem:[%s1 + $0x68] sm:$0xff]
      %v383 = vld [vmem:[%s1 + $0x70] sm:$0xff]
      %v384 = vld [vmem:[%s1 + $0x78] sm:$0xff]
      %v385 = vld [vmem:[%s2] sm:$0x3]
      %v387 = vlaneseq
      %v388 = vshrl.u32 %v387, 7
      %v389 = vsub.s32 0, %v388
      %v390 = vrot.slane %v385, %v389
      %v391 = vlaneseq
      %v392 = vshrl.u32 %v391, 7
      %v393 = vsub.s32 1, %v392
      %v394 = vrot.slane %v385, %v393
      %v429 = vunpack.c.l.b16 %v337
      %v430 = vunpack.c.l.b16 %v338
      %v431 = vunpack.c.l.b16 %v339
      %v432 = vunpack.c.l.b16 %v340
      %v433 = vunpack.c.l.b16 %v341
      %v434 = vunpack.c.l.b16 %v342
      %v435 = vunpack.c.l.b16 %v343
      %v436 = vunpack.c.l.b16 %v344
      %v437 = vunpack.c.l.b16 %v345
      %v438 = vunpack.c.l.b16 %v346
      %v439 = vunpack.c.l.b16 %v347
      %v440 = vunpack.c.l.b16 %v348
      %v441 = vunpack.c.l.b16 %v349
      %v442 = vunpack.c.l.b16 %v350
      %v443 = vunpack.c.l.b16 %v351
      %v444 = vunpack.c.l.b16 %v352
      %v445 = vunpack.c.l.b16 %v353
      %v446 = vunpack.c.l.b16 %v354
      %v447 = vunpack.c.l.b16 %v355
      %v448 = vunpack.c.l.b16 %v356
      %v449 = vunpack.c.l.b16 %v357
      %v450 = vunpack.c.l.b16 %v358
      %v451 = vunpack.c.l.b16 %v359
      %v452 = vunpack.c.l.b16 %v360
      %v453 = vunpack.c.l.b16 %v361
      %v454 = vunpack.c.l.b16 %v362
      %v455 = vunpack.c.l.b16 %v363
      %v456 = vunpack.c.l.b16 %v364
      %v457 = vunpack.c.l.b16 %v365
      %v458 = vunpack.c.l.b16 %v366
      %v459 = vunpack.c.l.b16 %v367
      %v460 = vunpack.c.l.b16 %v368
      %v461 = vpack.c.b16 %v430, %v429
      %v462 = vpack.c.b16 %v432, %v431
      %v463 = vpack.c.b16 %v434, %v433
      %v464 = vpack.c.b16 %v436, %v435
      %v465 = vpack.c.b16 %v438, %v437
      %v466 = vpack.c.b16 %v440, %v439
      %v467 = vpack.c.b16 %v442, %v441
      %v468 = vpack.c.b16 %v444, %v443
      %v469 = vpack.c.b16 %v446, %v445
      %v470 = vpack.c.b16 %v448, %v447
      %v471 = vpack.c.b16 %v450, %v449
      %v472 = vpack.c.b16 %v452, %v451
      %v473 = vpack.c.b16 %v454, %v453
      %v474 = vpack.c.b16 %v456, %v455
      %v475 = vpack.c.b16 %v458, %v457
      %v476 = vpack.c.b16 %v460, %v459
      %v509 = vunpack.c.l.b16 %v369
      %v510 = vunpack.c.h.b16 %v369
      %v511 = vunpack.c.l.b16 %v370
      %v512 = vunpack.c.h.b16 %v370
      %v513 = vunpack.c.l.b16 %v371
      %v514 = vunpack.c.h.b16 %v371
      %v515 = vunpack.c.l.b16 %v372
      %v516 = vunpack.c.h.b16 %v372
      %v517 = vunpack.c.l.b16 %v373
      %v518 = vunpack.c.h.b16 %v373
      %v519 = vunpack.c.l.b16 %v374
      %v520 = vunpack.c.h.b16 %v374
      %v521 = vunpack.c.l.b16 %v375
      %v522 = vunpack.c.h.b16 %v375
      %v523 = vunpack.c.l.b16 %v376
      %v524 = vunpack.c.h.b16 %v376
      %v525 = vunpack.c.l.b16 %v377
      %v526 = vunpack.c.h.b16 %v377
      %v527 = vunpack.c.l.b16 %v378
      %v528 = vunpack.c.h.b16 %v378
      %v529 = vunpack.c.l.b16 %v379
      %v530 = vunpack.c.h.b16 %v379
      %v531 = vunpack.c.l.b16 %v380
      %v532 = vunpack.c.h.b16 %v380
      %v533 = vunpack.c.l.b16 %v381
      %v534 = vunpack.c.h.b16 %v381
      %v535 = vunpack.c.l.b16 %v382
      %v536 = vunpack.c.h.b16 %v382
      %v537 = vunpack.c.l.b16 %v383
      %v538 = vunpack.c.h.b16 %v383
      %v539 = vunpack.c.l.b16 %v384
      %v540 = vunpack.c.h.b16 %v384
      %v541 = vpack.c.b16 %v511, %v509
      %v542 = vpack.c.b16 %v512, %v510
      %v543 = vpack.c.b16 %v515, %v513
      %v544 = vpack.c.b16 %v516, %v514
      %v545 = vpack.c.b16 %v519, %v517
      %v546 = vpack.c.b16 %v520, %v518
      %v547 = vpack.c.b16 %v523, %v521
      %v548 = vpack.c.b16 %v524, %v522
      %v549 = vpack.c.b16 %v527, %v525
      %v550 = vpack.c.b16 %v528, %v526
      %v551 = vpack.c.b16 %v531, %v529
      %v552 = vpack.c.b16 %v532, %v530
      %v553 = vpack.c.b16 %v535, %v533
      %v554 = vpack.c.b16 %v536, %v534
      %v555 = vpack.c.b16 %v539, %v537
      %v556 = vpack.c.b16 %v540, %v538
      %573 = vmatprep.subr.bf16.mxu0 %v556
      %574 = vmatpush1.bf16.msra.mxu0 %v555
      %575 = vmatprep.subr.bf16.mxu0 %v554
      %576 = vmatpush1.bf16.msra.mxu0 %v553
      %577 = vmatprep.subr.bf16.mxu0 %v552
      %578 = vmatpush1.bf16.msra.mxu0 %v551
      %579 = vmatprep.subr.bf16.mxu0 %v550
      %580 = vmatpush1.bf16.msra.mxu0 %v549
      %581 = vmatprep.subr.bf16.mxu0 %v548
      %582 = vmatpush1.bf16.msra.mxu0 %v547
      %583 = vmatprep.subr.bf16.mxu0 %v546
      %584 = vmatpush1.bf16.msra.mxu0 %v545
      %585 = vmatprep.subr.bf16.mxu0 %v544
      %586 = vmatpush1.bf16.msra.mxu0 %v543
      %587 = vmatprep.subr.bf16.mxu0 %v542
      %588 = vmatpush1.bf16.msra.mxu0 %v541
      %589 = vmatprep.subr.bf16.mxu0 0
      %590 = vmatpush2.bf16.msra.mxu0 0
      %591 = vmatprep.subr.bf16.mxu0 0
      %592 = vmatpush2.bf16.msra.mxu0 0
      %593 = vmatprep.subr.bf16.mxu0 0
      %594 = vmatpush2.bf16.msra.mxu0 0
      %595 = vmatprep.subr.bf16.mxu0 0
      %596 = vmatpush2.bf16.msra.mxu0 0
      %597 = vmatprep.subr.bf16.mxu0 0
      %598 = vmatpush2.bf16.msra.mxu0 0
      %599 = vmatprep.subr.bf16.mxu0 0
      %600 = vmatpush2.bf16.msra.mxu0 0
      %601 = vmatprep.subr.bf16.mxu0 0
      %602 = vmatpush2.bf16.msra.mxu0 0
      %603 = vmatprep.subr.bf16.mxu0 0
      %604 = vmatpush2.bf16.msra.mxu0 0
      %605 = vmatprep.mubr.bf16.mxu0 0
      %606 = vmatmul.mubr.bf16.gmra.mxu0 %v461
      %v607 = vpop.f32.mrf.mxu0
      %v608 = vadd.f32 %v390, %v607
      %v609 = vpop.f32.mrf.mxu0
      %v610 = vadd.f32 %v394, %v609
      %v611 = vpop.f32.mrf.mxu0
      %v612 = vadd.f32 %v390, %v611
      %v613 = vpop.f32.mrf.mxu0
      %v614 = vadd.f32 %v394, %v613
      %615 = vmatprep.mubr.bf16.mxu0 0
      %616 = vmatmul.mubr.bf16.gmra.mxu0 %v462
      %v617 = vpop.f32.mrf.mxu0
      %v618 = vadd.f32 %v390, %v617
      %v619 = vpop.f32.mrf.mxu0
      %v620 = vadd.f32 %v394, %v619
      %v621 = vpop.f32.mrf.mxu0
      %v622 = vadd.f32 %v390, %v621
      %v623 = vpop.f32.mrf.mxu0
      %v624 = vadd.f32 %v394, %v623
      %625 = vmatprep.mubr.bf16.mxu0 0
      %626 = vmatmul.mubr.bf16.gmra.mxu0 %v463
      %v627 = vpop.f32.mrf.mxu0
      %v628 = vadd.f32 %v390, %v627
      %v629 = vpop.f32.mrf.mxu0
      %v630 = vadd.f32 %v394, %v629
      %v631 = vpop.f32.mrf.mxu0
      %v632 = vadd.f32 %v390, %v631
      %v633 = vpop.f32.mrf.mxu0
      %v634 = vadd.f32 %v394, %v633
      %635 = vmatprep.mubr.bf16.mxu0 0
      %636 = vmatmul.mubr.bf16.gmra.mxu0 %v464
      %v637 = vpop.f32.mrf.mxu0
      %v638 = vadd.f32 %v390, %v637
      %v639 = vpop.f32.mrf.mxu0
      %v640 = vadd.f32 %v394, %v639
      %v641 = vpop.f32.mrf.mxu0
      %v642 = vadd.f32 %v390, %v641
      %v643 = vpop.f32.mrf.mxu0
      %v644 = vadd.f32 %v394, %v643
      %645 = vmatprep.mubr.bf16.mxu0 0
      %646 = vmatmul.mubr.bf16.gmra.mxu0 %v465
      %v647 = vpop.f32.mrf.mxu0
      %v648 = vadd.f32 %v390, %v647
      %v649 = vpop.f32.mrf.mxu0
      %v650 = vadd.f32 %v394, %v649
      %v651 = vpop.f32.mrf.mxu0
      %v652 = vadd.f32 %v390, %v651
      %v653 = vpop.f32.mrf.mxu0
      %v654 = vadd.f32 %v394, %v653
      %655 = vmatprep.mubr.bf16.mxu0 0
      %656 = vmatmul.mubr.bf16.gmra.mxu0 %v466
      %v657 = vpop.f32.mrf.mxu0
      %v658 = vadd.f32 %v390, %v657
      %v659 = vpop.f32.mrf.mxu0
      %v660 = vadd.f32 %v394, %v659
      %v661 = vpop.f32.mrf.mxu0
      %v662 = vadd.f32 %v390, %v661
      %v663 = vpop.f32.mrf.mxu0
      %v664 = vadd.f32 %v394, %v663
      %665 = vmatprep.mubr.bf16.mxu0 0
      %666 = vmatmul.mubr.bf16.gmra.mxu0 %v467
      %v667 = vpop.f32.mrf.mxu0
      %v668 = vadd.f32 %v390, %v667
      %v669 = vpop.f32.mrf.mxu0
      %v670 = vadd.f32 %v394, %v669
      %v671 = vpop.f32.mrf.mxu0
      %v672 = vadd.f32 %v390, %v671
      %v673 = vpop.f32.mrf.mxu0
      %v674 = vadd.f32 %v394, %v673
      %675 = vmatprep.mubr.bf16.mxu0 0
      %676 = vmatmul.mubr.bf16.gmra.mxu0 %v468
      %v677 = vpop.f32.mrf.mxu0
      %v678 = vadd.f32 %v390, %v677
      %v679 = vpop.f32.mrf.mxu0
      %v680 = vadd.f32 %v394, %v679
      %v681 = vpop.f32.mrf.mxu0
      %v682 = vadd.f32 %v390, %v681
      %v683 = vpop.f32.mrf.mxu0
      %v684 = vadd.f32 %v394, %v683
      %685 = vmatprep.mubr.bf16.mxu0 0
      %686 = vmatmul.mubr.bf16.gmra.mxu0 %v469
      %v687 = vpop.f32.mrf.mxu0
      %v688 = vadd.f32 %v390, %v687
      %v689 = vpop.f32.mrf.mxu0
      %v690 = vadd.f32 %v394, %v689
      %v691 = vpop.f32.mrf.mxu0
      %v692 = vadd.f32 %v390, %v691
      %v693 = vpop.f32.mrf.mxu0
      %v694 = vadd.f32 %v394, %v693
      %695 = vmatprep.mubr.bf16.mxu0 0
      %696 = vmatmul.mubr.bf16.gmra.mxu0 %v470
      %v697 = vpop.f32.mrf.mxu0
      %v698 = vadd.f32 %v390, %v697
      %v699 = vpop.f32.mrf.mxu0
      %v700 = vadd.f32 %v394, %v699
      %v701 = vpop.f32.mrf.mxu0
      %v702 = vadd.f32 %v390, %v701
      %v703 = vpop.f32.mrf.mxu0
      %v704 = vadd.f32 %v394, %v703
      %705 = vmatprep.mubr.bf16.mxu0 0
      %706 = vmatmul.mubr.bf16.gmra.mxu0 %v471
      %v707 = vpop.f32.mrf.mxu0
      %v708 = vadd.f32 %v390, %v707
      %v709 = vpop.f32.mrf.mxu0
      %v710 = vadd.f32 %v394, %v709
      %v711 = vpop.f32.mrf.mxu0
      %v712 = vadd.f32 %v390, %v711
      %v713 = vpop.f32.mrf.mxu0
      %v714 = vadd.f32 %v394, %v713
      %715 = vmatprep.mubr.bf16.mxu0 0
      %716 = vmatmul.mubr.bf16.gmra.mxu0 %v472
      %v717 = vpop.f32.mrf.mxu0
      %v718 = vadd.f32 %v390, %v717
      %v719 = vpop.f32.mrf.mxu0
      %v720 = vadd.f32 %v394, %v719
      %v721 = vpop.f32.mrf.mxu0
      %v722 = vadd.f32 %v390, %v721
      %v723 = vpop.f32.mrf.mxu0
      %v724 = vadd.f32 %v394, %v723
      %725 = vmatprep.mubr.bf16.mxu0 0
      %726 = vmatmul.mubr.bf16.gmra.mxu0 %v473
      %v727 = vpop.f32.mrf.mxu0
      %v728 = vadd.f32 %v390, %v727
      %v729 = vpop.f32.mrf.mxu0
      %v730 = vadd.f32 %v394, %v729
      %v731 = vpop.f32.mrf.mxu0
      %v732 = vadd.f32 %v390, %v731
      %v733 = vpop.f32.mrf.mxu0
      %v734 = vadd.f32 %v394, %v733
      %735 = vmatprep.mubr.bf16.mxu0 0
      %736 = vmatmul.mubr.bf16.gmra.mxu0 %v474
      %v737 = vpop.f32.mrf.mxu0
      %v738 = vadd.f32 %v390, %v737
      %v739 = vpop.f32.mrf.mxu0
      %v740 = vadd.f32 %v394, %v739
      %v741 = vpop.f32.mrf.mxu0
      %v742 = vadd.f32 %v390, %v741
      %v743 = vpop.f32.mrf.mxu0
      %v744 = vadd.f32 %v394, %v743
      %745 = vmatprep.mubr.bf16.mxu0 0
      %746 = vmatmul.mubr.bf16.gmra.mxu0 %v475
      %v747 = vpop.f32.mrf.mxu0
      %v748 = vadd.f32 %v390, %v747
      %v749 = vpop.f32.mrf.mxu0
      %v750 = vadd.f32 %v394, %v749
      %v751 = vpop.f32.mrf.mxu0
      %v752 = vadd.f32 %v390, %v751
      %v753 = vpop.f32.mrf.mxu0
      %v754 = vadd.f32 %v394, %v753
      %755 = vmatprep.mubr.bf16.mxu0 0
      %756 = vmatmul.mubr.bf16.gmra.mxu0 %v476
      %v757 = vpop.f32.mrf.mxu0
      %v758 = vadd.f32 %v390, %v757
      %v759 = vpop.f32.mrf.mxu0
      %v760 = vadd.f32 %v394, %v759
      %v761 = vpop.f32.mrf.mxu0
      %v762 = vadd.f32 %v390, %v761
      %v763 = vpop.f32.mrf.mxu0
      %v764 = vadd.f32 %v394, %v763
      %765 = vdwg.mxu0
      %vm766 = vcmp.gt.f32.partialorder %v608, 0.0
      %vm767 = vcmp.gt.f32.partialorder %v610, 0.0
      %vm768 = vcmp.gt.f32.partialorder %v612, 0.0
      %vm769 = vcmp.gt.f32.partialorder %v614, 0.0
      %vm770 = vcmp.gt.f32.partialorder %v618, 0.0
      %vm771 = vcmp.gt.f32.partialorder %v620, 0.0
      %vm772 = vcmp.gt.f32.partialorder %v622, 0.0
      %vm773 = vcmp.gt.f32.partialorder %v624, 0.0
      %vm774 = vcmp.gt.f32.partialorder %v628, 0.0
      %vm775 = vcmp.gt.f32.partialorder %v630, 0.0
      %vm776 = vcmp.gt.f32.partialorder %v632, 0.0
      %vm777 = vcmp.gt.f32.partialorder %v634, 0.0
      %vm778 = vcmp.gt.f32.partialorder %v638, 0.0
      %vm779 = vcmp.gt.f32.partialorder %v640, 0.0
      %vm780 = vcmp.gt.f32.partialorder %v642, 0.0
      %vm781 = vcmp.gt.f32.partialorder %v644, 0.0
      %vm782 = vcmp.gt.f32.partialorder %v648, 0.0
      %vm783 = vcmp.gt.f32.partialorder %v650, 0.0
      %vm784 = vcmp.gt.f32.partialorder %v652, 0.0
      %vm785 = vcmp.gt.f32.partialorder %v654, 0.0
      %vm786 = vcmp.gt.f32.partialorder %v658, 0.0
      %vm787 = vcmp.gt.f32.partialorder %v660, 0.0
      %vm788 = vcmp.gt.f32.partialorder %v662, 0.0
      %vm789 = vcmp.gt.f32.partialorder %v664, 0.0
      %vm790 = vcmp.gt.f32.partialorder %v668, 0.0
      %vm791 = vcmp.gt.f32.partialorder %v670, 0.0
      %vm792 = vcmp.gt.f32.partialorder %v672, 0.0
      %vm793 = vcmp.gt.f32.partialorder %v674, 0.0
      %vm794 = vcmp.gt.f32.partialorder %v678, 0.0
      %vm795 = vcmp.gt.f32.partialorder %v680, 0.0
      %vm796 = vcmp.gt.f32.partialorder %v682, 0.0
      %vm797 = vcmp.gt.f32.partialorder %v684, 0.0
      %vm798 = vcmp.gt.f32.partialorder %v688, 0.0
      %vm799 = vcmp.gt.f32.partialorder %v690, 0.0
      %vm800 = vcmp.gt.f32.partialorder %v692, 0.0
      %vm801 = vcmp.gt.f32.partialorder %v694, 0.0
      %vm802 = vcmp.gt.f32.partialorder %v698, 0.0
      %vm803 = vcmp.gt.f32.partialorder %v700, 0.0
      %vm804 = vcmp.gt.f32.partialorder %v702, 0.0
      %vm805 = vcmp.gt.f32.partialorder %v704, 0.0
      %vm806 = vcmp.gt.f32.partialorder %v708, 0.0
      %vm807 = vcmp.gt.f32.partialorder %v710, 0.0
      %vm808 = vcmp.gt.f32.partialorder %v712, 0.0
      %vm809 = vcmp.gt.f32.partialorder %v714, 0.0
      %vm810 = vcmp.gt.f32.partialorder %v718, 0.0
      %vm811 = vcmp.gt.f32.partialorder %v720, 0.0
      %vm812 = vcmp.gt.f32.partialorder %v722, 0.0
      %vm813 = vcmp.gt.f32.partialorder %v724, 0.0
      %vm814 = vcmp.gt.f32.partialorder %v728, 0.0
      %vm815 = vcmp.gt.f32.partialorder %v730, 0.0
      %vm816 = vcmp.gt.f32.partialorder %v732, 0.0
      %vm817 = vcmp.gt.f32.partialorder %v734, 0.0
      %vm818 = vcmp.gt.f32.partialorder %v738, 0.0
      %vm819 = vcmp.gt.f32.partialorder %v740, 0.0
      %vm820 = vcmp.gt.f32.partialorder %v742, 0.0
      %vm821 = vcmp.gt.f32.partialorder %v744, 0.0
      %vm822 = vcmp.gt.f32.partialorder %v748, 0.0
      %vm823 = vcmp.gt.f32.partialorder %v750, 0.0
      %vm824 = vcmp.gt.f32.partialorder %v752, 0.0
      %vm825 = vcmp.gt.f32.partialorder %v754, 0.0
      %vm826 = vcmp.gt.f32.partialorder %v758, 0.0
      %vm827 = vcmp.gt.f32.partialorder %v760, 0.0
      %vm828 = vcmp.gt.f32.partialorder %v762, 0.0
      %vm829 = vcmp.gt.f32.partialorder %v764, 0.0
      %v830 = vmul.f32 %v608, 1.442695
      %v831 = vpow.pop %v830
      %v832 = vmul.f32 %v610, 1.442695
      %v833 = vpow.pop %v832
      %v834 = vmul.f32 %v612, 1.442695
      %v835 = vpow.pop %v834
      %v836 = vmul.f32 %v614, 1.442695
      %v837 = vpow.pop %v836
      %v838 = vmul.f32 %v618, 1.442695
      %v839 = vpow.pop %v838
      %v840 = vmul.f32 %v620, 1.442695
      %v841 = vpow.pop %v840
      %v842 = vmul.f32 %v622, 1.442695
      %v843 = vpow.pop %v842
      %v844 = vmul.f32 %v624, 1.442695
      %v845 = vpow.pop %v844
      %v846 = vmul.f32 %v628, 1.442695
      %v847 = vpow.pop %v846
      %v848 = vmul.f32 %v630, 1.442695
      %v849 = vpow.pop %v848
      %v850 = vmul.f32 %v632, 1.442695
      %v851 = vpow.pop %v850
      %v852 = vmul.f32 %v634, 1.442695
      %v853 = vpow.pop %v852
      %v854 = vmul.f32 %v638, 1.442695
      %v855 = vpow.pop %v854
      %v856 = vmul.f32 %v640, 1.442695
      %v857 = vpow.pop %v856
      %v858 = vmul.f32 %v642, 1.442695
      %v859 = vpow.pop %v858
      %v860 = vmul.f32 %v644, 1.442695
      %v861 = vpow.pop %v860
      %v862 = vmul.f32 %v648, 1.442695
      %v863 = vpow.pop %v862
      %v864 = vmul.f32 %v650, 1.442695
      %v865 = vpow.pop %v864
      %v866 = vmul.f32 %v652, 1.442695
      %v867 = vpow.pop %v866
      %v868 = vmul.f32 %v654, 1.442695
      %v869 = vpow.pop %v868
      %v870 = vmul.f32 %v658, 1.442695
      %v871 = vpow.pop %v870
      %v872 = vmul.f32 %v660, 1.442695
      %v873 = vpow.pop %v872
      %v874 = vmul.f32 %v662, 1.442695
      %v875 = vpow.pop %v874
      %v876 = vmul.f32 %v664, 1.442695
      %v877 = vpow.pop %v876
      %v878 = vmul.f32 %v668, 1.442695
      %v879 = vpow.pop %v878
      %v880 = vmul.f32 %v670, 1.442695
      %v881 = vpow.pop %v880
      %v882 = vmul.f32 %v672, 1.442695
      %v883 = vpow.pop %v882
      %v884 = vmul.f32 %v674, 1.442695
      %v885 = vpow.pop %v884
      %v886 = vmul.f32 %v678, 1.442695
      %v887 = vpow.pop %v886
      %v888 = vmul.f32 %v680, 1.442695
      %v889 = vpow.pop %v888
      %v890 = vmul.f32 %v682, 1.442695
      %v891 = vpow.pop %v890
      %v892 = vmul.f32 %v684, 1.442695
      %v893 = vpow.pop %v892
      %v894 = vmul.f32 %v688, 1.442695
      %v895 = vpow.pop %v894
      %v896 = vmul.f32 %v690, 1.442695
      %v897 = vpow.pop %v896
      %v898 = vmul.f32 %v692, 1.442695
      %v899 = vpow.pop %v898
      %v900 = vmul.f32 %v694, 1.442695
      %v901 = vpow.pop %v900
      %v902 = vmul.f32 %v698, 1.442695
      %v903 = vpow.pop %v902
      %v904 = vmul.f32 %v700, 1.442695
      %v905 = vpow.pop %v904
      %v906 = vmul.f32 %v702, 1.442695
      %v907 = vpow.pop %v906
      %v908 = vmul.f32 %v704, 1.442695
      %v909 = vpow.pop %v908
      %v910 = vmul.f32 %v708, 1.442695
      %v911 = vpow.pop %v910
      %v912 = vmul.f32 %v710, 1.442695
      %v913 = vpow.pop %v912
      %v914 = vmul.f32 %v712, 1.442695
      %v915 = vpow.pop %v914
      %v916 = vmul.f32 %v714, 1.442695
      %v917 = vpow.pop %v916
      %v918 = vmul.f32 %v718, 1.442695
      %v919 = vpow.pop %v918
      %v920 = vmul.f32 %v720, 1.442695
      %v921 = vpow.pop %v920
      %v922 = vmul.f32 %v722, 1.442695
      %v923 = vpow.pop %v922
      %v924 = vmul.f32 %v724, 1.442695
      %v925 = vpow.pop %v924
      %v926 = vmul.f32 %v728, 1.442695
      %v927 = vpow.pop %v926
      %v928 = vmul.f32 %v730, 1.442695
      %v929 = vpow.pop %v928
      %v930 = vmul.f32 %v732, 1.442695
      %v931 = vpow.pop %v930
      %v932 = vmul.f32 %v734, 1.442695
      %v933 = vpow.pop %v932
      %v934 = vmul.f32 %v738, 1.442695
      %v935 = vpow.pop %v934
      %v936 = vmul.f32 %v740, 1.442695
      %v937 = vpow.pop %v936
      %v938 = vmul.f32 %v742, 1.442695
      %v939 = vpow.pop %v938
      %v940 = vmul.f32 %v744, 1.442695
      %v941 = vpow.pop %v940
      %v942 = vmul.f32 %v748, 1.442695
      %v943 = vpow.pop %v942
      %v944 = vmul.f32 %v750, 1.442695
      %v945 = vpow.pop %v944
      %v946 = vmul.f32 %v752, 1.442695
      %v947 = vpow.pop %v946
      %v948 = vmul.f32 %v754, 1.442695
      %v949 = vpow.pop %v948
      %v950 = vmul.f32 %v758, 1.442695
      %v951 = vpow.pop %v950
      %v952 = vmul.f32 %v760, 1.442695
      %v953 = vpow.pop %v952
      %v954 = vmul.f32 %v762, 1.442695
      %v955 = vpow.pop %v954
      %v956 = vmul.f32 %v764, 1.442695
      %v957 = vpow.pop %v956
      %v958 = vsub.f32 %v831, 1.0
      %v959 = vsub.f32 %v833, 1.0
      %v960 = vsub.f32 %v835, 1.0
      %v961 = vsub.f32 %v837, 1.0
      %v962 = vsub.f32 %v839, 1.0
      %v963 = vsub.f32 %v841, 1.0
      %v964 = vsub.f32 %v843, 1.0
      %v965 = vsub.f32 %v845, 1.0
      %v966 = vsub.f32 %v847, 1.0
      %v967 = vsub.f32 %v849, 1.0
      %v968 = vsub.f32 %v851, 1.0
      %v969 = vsub.f32 %v853, 1.0
      %v970 = vsub.f32 %v855, 1.0
      %v971 = vsub.f32 %v857, 1.0
      %v972 = vsub.f32 %v859, 1.0
      %v973 = vsub.f32 %v861, 1.0
      %v974 = vsub.f32 %v863, 1.0
      %v975 = vsub.f32 %v865, 1.0
      %v976 = vsub.f32 %v867, 1.0
      %v977 = vsub.f32 %v869, 1.0
      %v978 = vsub.f32 %v871, 1.0
      %v979 = vsub.f32 %v873, 1.0
      %v980 = vsub.f32 %v875, 1.0
      %v981 = vsub.f32 %v877, 1.0
      %v982 = vsub.f32 %v879, 1.0
      %v983 = vsub.f32 %v881, 1.0
      %v984 = vsub.f32 %v883, 1.0
      %v985 = vsub.f32 %v885, 1.0
      %v986 = vsub.f32 %v887, 1.0
      %v987 = vsub.f32 %v889, 1.0
      %v988 = vsub.f32 %v891, 1.0
      %v989 = vsub.f32 %v893, 1.0
      %v990 = vsub.f32 %v895, 1.0
      %v991 = vsub.f32 %v897, 1.0
      %v992 = vsub.f32 %v899, 1.0
      %v993 = vsub.f32 %v901, 1.0
      %v994 = vsub.f32 %v903, 1.0
      %v995 = vsub.f32 %v905, 1.0
      %v996 = vsub.f32 %v907, 1.0
      %v997 = vsub.f32 %v909, 1.0
      %v998 = vsub.f32 %v911, 1.0
      %v999 = vsub.f32 %v913, 1.0
      %v1000 = vsub.f32 %v915, 1.0
      %v1001 = vsub.f32 %v917, 1.0
      %v1002 = vsub.f32 %v919, 1.0
      %v1003 = vsub.f32 %v921, 1.0
      %v1004 = vsub.f32 %v923, 1.0
      %v1005 = vsub.f32 %v925, 1.0
      %v1006 = vsub.f32 %v927, 1.0
      %v1007 = vsub.f32 %v929, 1.0
      %v1008 = vsub.f32 %v931, 1.0
      %v1009 = vsub.f32 %v933, 1.0
      %v1010 = vsub.f32 %v935, 1.0
      %v1011 = vsub.f32 %v937, 1.0
      %v1012 = vsub.f32 %v939, 1.0
      %v1013 = vsub.f32 %v941, 1.0
      %v1014 = vsub.f32 %v943, 1.0
      %v1015 = vsub.f32 %v945, 1.0
      %v1016 = vsub.f32 %v947, 1.0
      %v1017 = vsub.f32 %v949, 1.0
      %v1018 = vsub.f32 %v951, 1.0
      %v1019 = vsub.f32 %v953, 1.0
      %v1020 = vsub.f32 %v955, 1.0
      %v1021 = vsub.f32 %v957, 1.0
      %v1022 = vsel %vm766, %v608, %v958
      %v1023 = vsel %vm767, %v610, %v959
      %v1024 = vsel %vm768, %v612, %v960
      %v1025 = vsel %vm769, %v614, %v961
      %v1026 = vsel %vm770, %v618, %v962
      %v1027 = vsel %vm771, %v620, %v963
      %v1028 = vsel %vm772, %v622, %v964
      %v1029 = vsel %vm773, %v624, %v965
      %v1030 = vsel %vm774, %v628, %v966
      %v1031 = vsel %vm775, %v630, %v967
      %v1032 = vsel %vm776, %v632, %v968
      %v1033 = vsel %vm777, %v634, %v969
      %v1034 = vsel %vm778, %v638, %v970
      %v1035 = vsel %vm779, %v640, %v971
      %v1036 = vsel %vm780, %v642, %v972
      %v1037 = vsel %vm781, %v644, %v973
      %v1038 = vsel %vm782, %v648, %v974
      %v1039 = vsel %vm783, %v650, %v975
      %v1040 = vsel %vm784, %v652, %v976
      %v1041 = vsel %vm785, %v654, %v977
      %v1042 = vsel %vm786, %v658, %v978
      %v1043 = vsel %vm787, %v660, %v979
      %v1044 = vsel %vm788, %v662, %v980
      %v1045 = vsel %vm789, %v664, %v981
      %v1046 = vsel %vm790, %v668, %v982
      %v1047 = vsel %vm791, %v670, %v983
      %v1048 = vsel %vm792, %v672, %v984
      %v1049 = vsel %vm793, %v674, %v985
      %v1050 = vsel %vm794, %v678, %v986
      %v1051 = vsel %vm795, %v680, %v987
      %v1052 = vsel %vm796, %v682, %v988
      %v1053 = vsel %vm797, %v684, %v989
      %v1054 = vsel %vm798, %v688, %v990
      %v1055 = vsel %vm799, %v690, %v991
      %v1056 = vsel %vm800, %v692, %v992
      %v1057 = vsel %vm801, %v694, %v993
      %v1058 = vsel %vm802, %v698, %v994
      %v1059 = vsel %vm803, %v700, %v995
      %v1060 = vsel %vm804, %v702, %v996
      %v1061 = vsel %vm805, %v704, %v997
      %v1062 = vsel %vm806, %v708, %v998
      %v1063 = vsel %vm807, %v710, %v999
      %v1064 = vsel %vm808, %v712, %v1000
      %v1065 = vsel %vm809, %v714, %v1001
      %v1066 = vsel %vm810, %v718, %v1002
      %v1067 = vsel %vm811, %v720, %v1003
      %v1068 = vsel %vm812, %v722, %v1004
      %v1069 = vsel %vm813, %v724, %v1005
      %v1070 = vsel %vm814, %v728, %v1006
      %v1071 = vsel %vm815, %v730, %v1007
      %v1072 = vsel %vm816, %v732, %v1008
      %v1073 = vsel %vm817, %v734, %v1009
      %v1074 = vsel %vm818, %v738, %v1010
      %v1075 = vsel %vm819, %v740, %v1011
      %v1076 = vsel %vm820, %v742, %v1012
      %v1077 = vsel %vm821, %v744, %v1013
      %v1078 = vsel %vm822, %v748, %v1014
      %v1079 = vsel %vm823, %v750, %v1015
      %v1080 = vsel %vm824, %v752, %v1016
      %v1081 = vsel %vm825, %v754, %v1017
      %v1082 = vsel %vm826, %v758, %v1018
      %v1083 = vsel %vm827, %v760, %v1019
      %v1084 = vsel %vm828, %v762, %v1020
      %v1085 = vsel %vm829, %v764, %v1021
      %v1086 = vpack.c.bf16 %v1024, %v1022
      %v1087 = vpack.c.bf16 %v1025, %v1023
      %v1088 = vpack.c.bf16 %v1028, %v1026
      %v1089 = vpack.c.bf16 %v1029, %v1027
      %v1090 = vpack.c.bf16 %v1032, %v1030
      %v1091 = vpack.c.bf16 %v1033, %v1031
      %v1092 = vpack.c.bf16 %v1036, %v1034
      %v1093 = vpack.c.bf16 %v1037, %v1035
      %v1094 = vpack.c.bf16 %v1040, %v1038
      %v1095 = vpack.c.bf16 %v1041, %v1039
      %v1096 = vpack.c.bf16 %v1044, %v1042
      %v1097 = vpack.c.bf16 %v1045, %v1043
      %v1098 = vpack.c.bf16 %v1048, %v1046
      %v1099 = vpack.c.bf16 %v1049, %v1047
      %v1100 = vpack.c.bf16 %v1052, %v1050
      %v1101 = vpack.c.bf16 %v1053, %v1051
      %v1102 = vpack.c.bf16 %v1056, %v1054
      %v1103 = vpack.c.bf16 %v1057, %v1055
      %v1104 = vpack.c.bf16 %v1060, %v1058
      %v1105 = vpack.c.bf16 %v1061, %v1059
      %v1106 = vpack.c.bf16 %v1064, %v1062
      %v1107 = vpack.c.bf16 %v1065, %v1063
      %v1108 = vpack.c.bf16 %v1068, %v1066
      %v1109 = vpack.c.bf16 %v1069, %v1067
      %v1110 = vpack.c.bf16 %v1072, %v1070
      %v1111 = vpack.c.bf16 %v1073, %v1071
      %v1112 = vpack.c.bf16 %v1076, %v1074
      %v1113 = vpack.c.bf16 %v1077, %v1075
      %v1114 = vpack.c.bf16 %v1080, %v1078
      %v1115 = vpack.c.bf16 %v1081, %v1079
      %v1116 = vpack.c.bf16 %v1084, %v1082
      %v1117 = vpack.c.bf16 %v1085, %v1083
      %v1118 = vld [vmem:[%s3] sm:$0xff]
      %v1119 = vld [vmem:[%s3 + $0x8] sm:$0xff]
      %v1120 = vld [vmem:[%s3 + $0x10] sm:$0xff]
      %v1121 = vld [vmem:[%s3 + $0x18] sm:$0xff]
      %v1122 = vld [vmem:[%s3 + $0x20] sm:$0xff]
      %v1123 = vld [vmem:[%s3 + $0x28] sm:$0xff]
      %v1124 = vld [vmem:[%s3 + $0x30] sm:$0xff]
      %v1125 = vld [vmem:[%s3 + $0x38] sm:$0xff]
      %v1126 = vld [vmem:[%s3 + $0x40] sm:$0xff]
      %v1127 = vld [vmem:[%s3 + $0x48] sm:$0xff]
      %v1128 = vld [vmem:[%s3 + $0x50] sm:$0xff]
      %v1129 = vld [vmem:[%s3 + $0x58] sm:$0xff]
      %v1130 = vld [vmem:[%s3 + $0x60] sm:$0xff]
      %v1131 = vld [vmem:[%s3 + $0x68] sm:$0xff]
      %v1132 = vld [vmem:[%s3 + $0x70] sm:$0xff]
      %v1133 = vld [vmem:[%s3 + $0x78] sm:$0xff]
      %v1134 = vld [vmem:[%s3 + $0x80] sm:$0xff]
      %v1135 = vld [vmem:[%s3 + $0x88] sm:$0xff]
      %v1136 = vld [vmem:[%s3 + $0x90] sm:$0xff]
      %v1137 = vld [vmem:[%s3 + $0x98] sm:$0xff]
      %v1138 = vld [vmem:[%s3 + $0xa0] sm:$0xff]
      %v1139 = vld [vmem:[%s3 + $0xa8] sm:$0xff]
      %v1140 = vld [vmem:[%s3 + $0xb0] sm:$0xff]
      %v1141 = vld [vmem:[%s3 + $0xb8] sm:$0xff]
      %v1142 = vld [vmem:[%s3 + $0xc0] sm:$0xff]
      %v1143 = vld [vmem:[%s3 + $0xc8] sm:$0xff]
      %v1144 = vld [vmem:[%s3 + $0xd0] sm:$0xff]
      %v1145 = vld [vmem:[%s3 + $0xd8] sm:$0xff]
      %v1146 = vld [vmem:[%s3 + $0xe0] sm:$0xff]
      %v1147 = vld [vmem:[%s3 + $0xe8] sm:$0xff]
      %v1148 = vld [vmem:[%s3 + $0xf0] sm:$0xff]
      %v1149 = vld [vmem:[%s3 + $0xf8] sm:$0xff]
      %v1150 = vld [vmem:[%s4] sm:$0x3]
      %v1152 = vlaneseq
      %v1153 = vshrl.u32 %v1152, 7
      %v1154 = vsub.s32 0, %v1153
      %v1155 = vrot.slane %v1150, %v1154
      %v1156 = vlaneseq
      %v1157 = vshrl.u32 %v1156, 7
      %v1158 = vsub.s32 1, %v1157
      %v1159 = vrot.slane %v1150, %v1158
      %v1194 = vunpack.c.l.b16 %v1118
      %v1195 = vunpack.c.h.b16 %v1118
      %v1196 = vunpack.c.l.b16 %v1119
      %v1197 = vunpack.c.h.b16 %v1119
      %v1198 = vunpack.c.l.b16 %v1120
      %v1199 = vunpack.c.h.b16 %v1120
      %v1200 = vunpack.c.l.b16 %v1121
      %v1201 = vunpack.c.h.b16 %v1121
      %v1202 = vunpack.c.l.b16 %v1122
      %v1203 = vunpack.c.h.b16 %v1122
      %v1204 = vunpack.c.l.b16 %v1123
      %v1205 = vunpack.c.h.b16 %v1123
      %v1206 = vunpack.c.l.b16 %v1124
      %v1207 = vunpack.c.h.b16 %v1124
      %v1208 = vunpack.c.l.b16 %v1125
      %v1209 = vunpack.c.h.b16 %v1125
      %v1210 = vunpack.c.l.b16 %v1126
      %v1211 = vunpack.c.h.b16 %v1126
      %v1212 = vunpack.c.l.b16 %v1127
      %v1213 = vunpack.c.h.b16 %v1127
      %v1214 = vunpack.c.l.b16 %v1128
      %v1215 = vunpack.c.h.b16 %v1128
      %v1216 = vunpack.c.l.b16 %v1129
      %v1217 = vunpack.c.h.b16 %v1129
      %v1218 = vunpack.c.l.b16 %v1130
      %v1219 = vunpack.c.h.b16 %v1130
      %v1220 = vunpack.c.l.b16 %v1131
      %v1221 = vunpack.c.h.b16 %v1131
      %v1222 = vunpack.c.l.b16 %v1132
      %v1223 = vunpack.c.h.b16 %v1132
      %v1224 = vunpack.c.l.b16 %v1133
      %v1225 = vunpack.c.h.b16 %v1133
      %v1226 = vunpack.c.l.b16 %v1134
      %v1227 = vunpack.c.h.b16 %v1134
      %v1228 = vunpack.c.l.b16 %v1135
      %v1229 = vunpack.c.h.b16 %v1135
      %v1230 = vunpack.c.l.b16 %v1136
      %v1231 = vunpack.c.h.b16 %v1136
      %v1232 = vunpack.c.l.b16 %v1137
      %v1233 = vunpack.c.h.b16 %v1137
      %v1234 = vunpack.c.l.b16 %v1138
      %v1235 = vunpack.c.h.b16 %v1138
      %v1236 = vunpack.c.l.b16 %v1139
      %v1237 = vunpack.c.h.b16 %v1139
      %v1238 = vunpack.c.l.b16 %v1140
      %v1239 = vunpack.c.h.b16 %v1140
      %v1240 = vunpack.c.l.b16 %v1141
      %v1241 = vunpack.c.h.b16 %v1141
      %v1242 = vunpack.c.l.b16 %v1142
      %v1243 = vunpack.c.h.b16 %v1142
      %v1244 = vunpack.c.l.b16 %v1143
      %v1245 = vunpack.c.h.b16 %v1143
      %v1246 = vunpack.c.l.b16 %v1144
      %v1247 = vunpack.c.h.b16 %v1144
      %v1248 = vunpack.c.l.b16 %v1145
      %v1249 = vunpack.c.h.b16 %v1145
      %v1250 = vunpack.c.l.b16 %v1146
      %v1251 = vunpack.c.h.b16 %v1146
      %v1252 = vunpack.c.l.b16 %v1147
      %v1253 = vunpack.c.h.b16 %v1147
      %v1254 = vunpack.c.l.b16 %v1148
      %v1255 = vunpack.c.h.b16 %v1148
      %v1256 = vunpack.c.l.b16 %v1149
      %v1257 = vunpack.c.h.b16 %v1149
      %v1258 = vpack.c.b16 %v1196, %v1194
      %v1259 = vpack.c.b16 %v1197, %v1195
      %v1260 = vpack.c.b16 %v1200, %v1198
      %v1261 = vpack.c.b16 %v1201, %v1199
      %v1262 = vpack.c.b16 %v1204, %v1202
      %v1263 = vpack.c.b16 %v1205, %v1203
      %v1264 = vpack.c.b16 %v1208, %v1206
      %v1265 = vpack.c.b16 %v1209, %v1207
      %v1266 = vpack.c.b16 %v1212, %v1210
      %v1267 = vpack.c.b16 %v1213, %v1211
      %v1268 = vpack.c.b16 %v1216, %v1214
      %v1269 = vpack.c.b16 %v1217, %v1215
      %v1270 = vpack.c.b16 %v1220, %v1218
      %v1271 = vpack.c.b16 %v1221, %v1219
      %v1272 = vpack.c.b16 %v1224, %v1222
      %v1273 = vpack.c.b16 %v1225, %v1223
      %v1274 = vpack.c.b16 %v1228, %v1226
      %v1275 = vpack.c.b16 %v1229, %v1227
      %v1276 = vpack.c.b16 %v1232, %v1230
      %v1277 = vpack.c.b16 %v1233, %v1231
      %v1278 = vpack.c.b16 %v1236, %v1234
      %v1279 = vpack.c.b16 %v1237, %v1235
      %v1280 = vpack.c.b16 %v1240, %v1238
      %v1281 = vpack.c.b16 %v1241, %v1239
      %v1282 = vpack.c.b16 %v1244, %v1242
      %v1283 = vpack.c.b16 %v1245, %v1243
      %v1284 = vpack.c.b16 %v1248, %v1246
      %v1285 = vpack.c.b16 %v1249, %v1247
      %v1286 = vpack.c.b16 %v1252, %v1250
      %v1287 = vpack.c.b16 %v1253, %v1251
      %v1288 = vpack.c.b16 %v1256, %v1254
      %v1289 = vpack.c.b16 %v1257, %v1255
      %1322 = vmatprep.subr.bf16.mxu0 %v1273
      %1323 = vmatpush1.bf16.msra.mxu0 %v1272
      %1324 = vmatprep.subr.bf16.mxu0 %v1271
      %1325 = vmatpush1.bf16.msra.mxu0 %v1270
      %1326 = vmatprep.subr.bf16.mxu0 %v1269
      %1327 = vmatpush1.bf16.msra.mxu0 %v1268
      %1328 = vmatprep.subr.bf16.mxu0 %v1267
      %1329 = vmatpush1.bf16.msra.mxu0 %v1266
      %1330 = vmatprep.subr.bf16.mxu0 %v1265
      %1331 = vmatpush1.bf16.msra.mxu0 %v1264
      %1332 = vmatprep.subr.bf16.mxu0 %v1263
      %1333 = vmatpush1.bf16.msra.mxu0 %v1262
      %1334 = vmatprep.subr.bf16.mxu0 %v1261
      %1335 = vmatpush1.bf16.msra.mxu0 %v1260
      %1336 = vmatprep.subr.bf16.mxu0 %v1259
      %1337 = vmatpush1.bf16.msra.mxu0 %v1258
      %1338 = vmatprep.subr.bf16.mxu0 %v1289
      %1339 = vmatpush2.bf16.msra.mxu0 %v1288
      %1340 = vmatprep.subr.bf16.mxu0 %v1287
      %1341 = vmatpush2.bf16.msra.mxu0 %v1286
      %1342 = vmatprep.subr.bf16.mxu0 %v1285
      %1343 = vmatpush2.bf16.msra.mxu0 %v1284
      %1344 = vmatprep.subr.bf16.mxu0 %v1283
      %1345 = vmatpush2.bf16.msra.mxu0 %v1282
      %1346 = vmatprep.subr.bf16.mxu0 %v1281
      %1347 = vmatpush2.bf16.msra.mxu0 %v1280
      %1348 = vmatprep.subr.bf16.mxu0 %v1279
      %1349 = vmatpush2.bf16.msra.mxu0 %v1278
      %1350 = vmatprep.subr.bf16.mxu0 %v1277
      %1351 = vmatpush2.bf16.msra.mxu0 %v1276
      %1352 = vmatprep.subr.bf16.mxu0 %v1275
      %1353 = vmatpush2.bf16.msra.mxu0 %v1274
      %1354 = vmatprep.mubr.bf16.mxu0 %v1087
      %1355 = vmatmul.mubr.bf16.gmra.mxu0 %v1086
      %v1356 = vpop.f32.mrf.mxu0
      %v1357 = vadd.f32 %v1155, %v1356
      %v1358 = vpop.f32.mrf.mxu0
      %v1359 = vadd.f32 %v1159, %v1358
      %v1360 = vpop.f32.mrf.mxu0
      %v1361 = vadd.f32 %v1155, %v1360
      %v1362 = vpop.f32.mrf.mxu0
      %v1363 = vadd.f32 %v1159, %v1362
      %1364 = vmatprep.mubr.bf16.mxu0 %v1089
      %1365 = vmatmul.mubr.bf16.gmra.mxu0 %v1088
      %v1366 = vpop.f32.mrf.mxu0
      %v1367 = vadd.f32 %v1155, %v1366
      %v1368 = vpop.f32.mrf.mxu0
      %v1369 = vadd.f32 %v1159, %v1368
      %v1370 = vpop.f32.mrf.mxu0
      %v1371 = vadd.f32 %v1155, %v1370
      %v1372 = vpop.f32.mrf.mxu0
      %v1373 = vadd.f32 %v1159, %v1372
      %1374 = vmatprep.mubr.bf16.mxu0 %v1091
      %1375 = vmatmul.mubr.bf16.gmra.mxu0 %v1090
      %v1376 = vpop.f32.mrf.mxu0
      %v1377 = vadd.f32 %v1155, %v1376
      %v1378 = vpop.f32.mrf.mxu0
      %v1379 = vadd.f32 %v1159, %v1378
      %v1380 = vpop.f32.mrf.mxu0
      %v1381 = vadd.f32 %v1155, %v1380
      %v1382 = vpop.f32.mrf.mxu0
      %v1383 = vadd.f32 %v1159, %v1382
      %1384 = vmatprep.mubr.bf16.mxu0 %v1093
      %1385 = vmatmul.mubr.bf16.gmra.mxu0 %v1092
      %v1386 = vpop.f32.mrf.mxu0
      %v1387 = vadd.f32 %v1155, %v1386
      %v1388 = vpop.f32.mrf.mxu0
      %v1389 = vadd.f32 %v1159, %v1388
      %v1390 = vpop.f32.mrf.mxu0
      %v1391 = vadd.f32 %v1155, %v1390
      %v1392 = vpop.f32.mrf.mxu0
      %v1393 = vadd.f32 %v1159, %v1392
      %1394 = vmatprep.mubr.bf16.mxu0 %v1095
      %1395 = vmatmul.mubr.bf16.gmra.mxu0 %v1094
      %v1396 = vpop.f32.mrf.mxu0
      %v1397 = vadd.f32 %v1155, %v1396
      %v1398 = vpop.f32.mrf.mxu0
      %v1399 = vadd.f32 %v1159, %v1398
      %v1400 = vpop.f32.mrf.mxu0
      %v1401 = vadd.f32 %v1155, %v1400
      %v1402 = vpop.f32.mrf.mxu0
      %v1403 = vadd.f32 %v1159, %v1402
      %1404 = vmatprep.mubr.bf16.mxu0 %v1097
      %1405 = vmatmul.mubr.bf16.gmra.mxu0 %v1096
      %v1406 = vpop.f32.mrf.mxu0
      %v1407 = vadd.f32 %v1155, %v1406
      %v1408 = vpop.f32.mrf.mxu0
      %v1409 = vadd.f32 %v1159, %v1408
      %v1410 = vpop.f32.mrf.mxu0
      %v1411 = vadd.f32 %v1155, %v1410
      %v1412 = vpop.f32.mrf.mxu0
      %v1413 = vadd.f32 %v1159, %v1412
      %1414 = vmatprep.mubr.bf16.mxu0 %v1099
      %1415 = vmatmul.mubr.bf16.gmra.mxu0 %v1098
      %v1416 = vpop.f32.mrf.mxu0
      %v1417 = vadd.f32 %v1155, %v1416
      %v1418 = vpop.f32.mrf.mxu0
      %v1419 = vadd.f32 %v1159, %v1418
      %v1420 = vpop.f32.mrf.mxu0
      %v1421 = vadd.f32 %v1155, %v1420
      %v1422 = vpop.f32.mrf.mxu0
      %v1423 = vadd.f32 %v1159, %v1422
      %1424 = vmatprep.mubr.bf16.mxu0 %v1101
      %1425 = vmatmul.mubr.bf16.gmra.mxu0 %v1100
      %v1426 = vpop.f32.mrf.mxu0
      %v1427 = vadd.f32 %v1155, %v1426
      %v1428 = vpop.f32.mrf.mxu0
      %v1429 = vadd.f32 %v1159, %v1428
      %v1430 = vpop.f32.mrf.mxu0
      %v1431 = vadd.f32 %v1155, %v1430
      %v1432 = vpop.f32.mrf.mxu0
      %v1433 = vadd.f32 %v1159, %v1432
      %1434 = vmatprep.mubr.bf16.mxu0 %v1103
      %1435 = vmatmul.mubr.bf16.gmra.mxu0 %v1102
      %v1436 = vpop.f32.mrf.mxu0
      %v1437 = vadd.f32 %v1155, %v1436
      %v1438 = vpop.f32.mrf.mxu0
      %v1439 = vadd.f32 %v1159, %v1438
      %v1440 = vpop.f32.mrf.mxu0
      %v1441 = vadd.f32 %v1155, %v1440
      %v1442 = vpop.f32.mrf.mxu0
      %v1443 = vadd.f32 %v1159, %v1442
      %1444 = vmatprep.mubr.bf16.mxu0 %v1105
      %1445 = vmatmul.mubr.bf16.gmra.mxu0 %v1104
      %v1446 = vpop.f32.mrf.mxu0
      %v1447 = vadd.f32 %v1155, %v1446
      %v1448 = vpop.f32.mrf.mxu0
      %v1449 = vadd.f32 %v1159, %v1448
      %v1450 = vpop.f32.mrf.mxu0
      %v1451 = vadd.f32 %v1155, %v1450
      %v1452 = vpop.f32.mrf.mxu0
      %v1453 = vadd.f32 %v1159, %v1452
      %1454 = vmatprep.mubr.bf16.mxu0 %v1107
      %1455 = vmatmul.mubr.bf16.gmra.mxu0 %v1106
      %v1456 = vpop.f32.mrf.mxu0
      %v1457 = vadd.f32 %v1155, %v1456
      %v1458 = vpop.f32.mrf.mxu0
      %v1459 = vadd.f32 %v1159, %v1458
      %v1460 = vpop.f32.mrf.mxu0
      %v1461 = vadd.f32 %v1155, %v1460
      %v1462 = vpop.f32.mrf.mxu0
      %v1463 = vadd.f32 %v1159, %v1462
      %1464 = vmatprep.mubr.bf16.mxu0 %v1109
      %1465 = vmatmul.mubr.bf16.gmra.mxu0 %v1108
      %v1466 = vpop.f32.mrf.mxu0
      %v1467 = vadd.f32 %v1155, %v1466
      %v1468 = vpop.f32.mrf.mxu0
      %v1469 = vadd.f32 %v1159, %v1468
      %v1470 = vpop.f32.mrf.mxu0
      %v1471 = vadd.f32 %v1155, %v1470
      %v1472 = vpop.f32.mrf.mxu0
      %v1473 = vadd.f32 %v1159, %v1472
      %1474 = vmatprep.mubr.bf16.mxu0 %v1111
      %1475 = vmatmul.mubr.bf16.gmra.mxu0 %v1110
      %v1476 = vpop.f32.mrf.mxu0
      %v1477 = vadd.f32 %v1155, %v1476
      %v1478 = vpop.f32.mrf.mxu0
      %v1479 = vadd.f32 %v1159, %v1478
      %v1480 = vpop.f32.mrf.mxu0
      %v1481 = vadd.f32 %v1155, %v1480
      %v1482 = vpop.f32.mrf.mxu0
      %v1483 = vadd.f32 %v1159, %v1482
      %1484 = vmatprep.mubr.bf16.mxu0 %v1113
      %1485 = vmatmul.mubr.bf16.gmra.mxu0 %v1112
      %v1486 = vpop.f32.mrf.mxu0
      %v1487 = vadd.f32 %v1155, %v1486
      %v1488 = vpop.f32.mrf.mxu0
      %v1489 = vadd.f32 %v1159, %v1488
      %v1490 = vpop.f32.mrf.mxu0
      %v1491 = vadd.f32 %v1155, %v1490
      %v1492 = vpop.f32.mrf.mxu0
      %v1493 = vadd.f32 %v1159, %v1492
      %1494 = vmatprep.mubr.bf16.mxu0 %v1115
      %1495 = vmatmul.mubr.bf16.gmra.mxu0 %v1114
      %v1496 = vpop.f32.mrf.mxu0
      %v1497 = vadd.f32 %v1155, %v1496
      %v1498 = vpop.f32.mrf.mxu0
      %v1499 = vadd.f32 %v1159, %v1498
      %v1500 = vpop.f32.mrf.mxu0
      %v1501 = vadd.f32 %v1155, %v1500
      %v1502 = vpop.f32.mrf.mxu0
      %v1503 = vadd.f32 %v1159, %v1502
      %1504 = vmatprep.mubr.bf16.mxu0 %v1117
      %1505 = vmatmul.mubr.bf16.gmra.mxu0 %v1116
      %v1506 = vpop.f32.mrf.mxu0
      %v1507 = vadd.f32 %v1155, %v1506
      %v1508 = vpop.f32.mrf.mxu0
      %v1509 = vadd.f32 %v1159, %v1508
      %v1510 = vpop.f32.mrf.mxu0
      %v1511 = vadd.f32 %v1155, %v1510
      %v1512 = vpop.f32.mrf.mxu0
      %v1513 = vadd.f32 %v1159, %v1512
      %1514 = vdwg.mxu0
      %vm1515 = vcmp.gt.f32.partialorder %v1357, 0.0
      %vm1516 = vcmp.gt.f32.partialorder %v1359, 0.0
      %vm1517 = vcmp.gt.f32.partialorder %v1361, 0.0
      %vm1518 = vcmp.gt.f32.partialorder %v1363, 0.0
      %vm1519 = vcmp.gt.f32.partialorder %v1367, 0.0
      %vm1520 = vcmp.gt.f32.partialorder %v1369, 0.0
      %vm1521 = vcmp.gt.f32.partialorder %v1371, 0.0
      %vm1522 = vcmp.gt.f32.partialorder %v1373, 0.0
      %vm1523 = vcmp.gt.f32.partialorder %v1377, 0.0
      %vm1524 = vcmp.gt.f32.partialorder %v1379, 0.0
      %vm1525 = vcmp.gt.f32.partialorder %v1381, 0.0
      %vm1526 = vcmp.gt.f32.partialorder %v1383, 0.0
      %vm1527 = vcmp.gt.f32.partialorder %v1387, 0.0
      %vm1528 = vcmp.gt.f32.partialorder %v1389, 0.0
      %vm1529 = vcmp.gt.f32.partialorder %v1391, 0.0
      %vm1530 = vcmp.gt.f32.partialorder %v1393, 0.0
      %vm1531 = vcmp.gt.f32.partialorder %v1397, 0.0
      %vm1532 = vcmp.gt.f32.partialorder %v1399, 0.0
      %vm1533 = vcmp.gt.f32.partialorder %v1401, 0.0
      %vm1534 = vcmp.gt.f32.partialorder %v1403, 0.0
      %vm1535 = vcmp.gt.f32.partialorder %v1407, 0.0
      %vm1536 = vcmp.gt.f32.partialorder %v1409, 0.0
      %vm1537 = vcmp.gt.f32.partialorder %v1411, 0.0
      %vm1538 = vcmp.gt.f32.partialorder %v1413, 0.0
      %vm1539 = vcmp.gt.f32.partialorder %v1417, 0.0
      %vm1540 = vcmp.gt.f32.partialorder %v1419, 0.0
      %vm1541 = vcmp.gt.f32.partialorder %v1421, 0.0
      %vm1542 = vcmp.gt.f32.partialorder %v1423, 0.0
      %vm1543 = vcmp.gt.f32.partialorder %v1427, 0.0
      %vm1544 = vcmp.gt.f32.partialorder %v1429, 0.0
      %vm1545 = vcmp.gt.f32.partialorder %v1431, 0.0
      %vm1546 = vcmp.gt.f32.partialorder %v1433, 0.0
      %vm1547 = vcmp.gt.f32.partialorder %v1437, 0.0
      %vm1548 = vcmp.gt.f32.partialorder %v1439, 0.0
      %vm1549 = vcmp.gt.f32.partialorder %v1441, 0.0
      %vm1550 = vcmp.gt.f32.partialorder %v1443, 0.0
      %vm1551 = vcmp.gt.f32.partialorder %v1447, 0.0
      %vm1552 = vcmp.gt.f32.partialorder %v1449, 0.0
      %vm1553 = vcmp.gt.f32.partialorder %v1451, 0.0
      %vm1554 = vcmp.gt.f32.partialorder %v1453, 0.0
      %vm1555 = vcmp.gt.f32.partialorder %v1457, 0.0
      %vm1556 = vcmp.gt.f32.partialorder %v1459, 0.0
      %vm1557 = vcmp.gt.f32.partialorder %v1461, 0.0
      %vm1558 = vcmp.gt.f32.partialorder %v1463, 0.0
      %vm1559 = vcmp.gt.f32.partialorder %v1467, 0.0
      %vm1560 = vcmp.gt.f32.partialorder %v1469, 0.0
      %vm1561 = vcmp.gt.f32.partialorder %v1471, 0.0
      %vm1562 = vcmp.gt.f32.partialorder %v1473, 0.0
      %vm1563 = vcmp.gt.f32.partialorder %v1477, 0.0
      %vm1564 = vcmp.gt.f32.partialorder %v1479, 0.0
      %vm1565 = vcmp.gt.f32.partialorder %v1481, 0.0
      %vm1566 = vcmp.gt.f32.partialorder %v1483, 0.0
      %vm1567 = vcmp.gt.f32.partialorder %v1487, 0.0
      %vm1568 = vcmp.gt.f32.partialorder %v1489, 0.0
      %vm1569 = vcmp.gt.f32.partialorder %v1491, 0.0
      %vm1570 = vcmp.gt.f32.partialorder %v1493, 0.0
      %vm1571 = vcmp.gt.f32.partialorder %v1497, 0.0
      %vm1572 = vcmp.gt.f32.partialorder %v1499, 0.0
      %vm1573 = vcmp.gt.f32.partialorder %v1501, 0.0
      %vm1574 = vcmp.gt.f32.partialorder %v1503, 0.0
      %vm1575 = vcmp.gt.f32.partialorder %v1507, 0.0
      %vm1576 = vcmp.gt.f32.partialorder %v1509, 0.0
      %vm1577 = vcmp.gt.f32.partialorder %v1511, 0.0
      %vm1578 = vcmp.gt.f32.partialorder %v1513, 0.0
      %v1579 = vmul.f32 %v1357, 1.442695
      %v1580 = vpow.pop %v1579
      %v1581 = vmul.f32 %v1359, 1.442695
      %v1582 = vpow.pop %v1581
      %v1583 = vmul.f32 %v1361, 1.442695
      %v1584 = vpow.pop %v1583
      %v1585 = vmul.f32 %v1363, 1.442695
      %v1586 = vpow.pop %v1585
      %v1587 = vmul.f32 %v1367, 1.442695
      %v1588 = vpow.pop %v1587
      %v1589 = vmul.f32 %v1369, 1.442695
      %v1590 = vpow.pop %v1589
      %v1591 = vmul.f32 %v1371, 1.442695
      %v1592 = vpow.pop %v1591
      %v1593 = vmul.f32 %v1373, 1.442695
      %v1594 = vpow.pop %v1593
      %v1595 = vmul.f32 %v1377, 1.442695
      %v1596 = vpow.pop %v1595
      %v1597 = vmul.f32 %v1379, 1.442695
      %v1598 = vpow.pop %v1597
      %v1599 = vmul.f32 %v1381, 1.442695
      %v1600 = vpow.pop %v1599
      %v1601 = vmul.f32 %v1383, 1.442695
      %v1602 = vpow.pop %v1601
      %v1603 = vmul.f32 %v1387, 1.442695
      %v1604 = vpow.pop %v1603
      %v1605 = vmul.f32 %v1389, 1.442695
      %v1606 = vpow.pop %v1605
      %v1607 = vmul.f32 %v1391, 1.442695
      %v1608 = vpow.pop %v1607
      %v1609 = vmul.f32 %v1393, 1.442695
      %v1610 = vpow.pop %v1609
      %v1611 = vmul.f32 %v1397, 1.442695
      %v1612 = vpow.pop %v1611
      %v1613 = vmul.f32 %v1399, 1.442695
      %v1614 = vpow.pop %v1613
      %v1615 = vmul.f32 %v1401, 1.442695
      %v1616 = vpow.pop %v1615
      %v1617 = vmul.f32 %v1403, 1.442695
      %v1618 = vpow.pop %v1617
      %v1619 = vmul.f32 %v1407, 1.442695
      %v1620 = vpow.pop %v1619
      %v1621 = vmul.f32 %v1409, 1.442695
      %v1622 = vpow.pop %v1621
      %v1623 = vmul.f32 %v1411, 1.442695
      %v1624 = vpow.pop %v1623
      %v1625 = vmul.f32 %v1413, 1.442695
      %v1626 = vpow.pop %v1625
      %v1627 = vmul.f32 %v1417, 1.442695
      %v1628 = vpow.pop %v1627
      %v1629 = vmul.f32 %v1419, 1.442695
      %v1630 = vpow.pop %v1629
      %v1631 = vmul.f32 %v1421, 1.442695
      %v1632 = vpow.pop %v1631
      %v1633 = vmul.f32 %v1423, 1.442695
      %v1634 = vpow.pop %v1633
      %v1635 = vmul.f32 %v1427, 1.442695
      %v1636 = vpow.pop %v1635
      %v1637 = vmul.f32 %v1429, 1.442695
      %v1638 = vpow.pop %v1637
      %v1639 = vmul.f32 %v1431, 1.442695
      %v1640 = vpow.pop %v1639
      %v1641 = vmul.f32 %v1433, 1.442695
      %v1642 = vpow.pop %v1641
      %v1643 = vmul.f32 %v1437, 1.442695
      %v1644 = vpow.pop %v1643
      %v1645 = vmul.f32 %v1439, 1.442695
      %v1646 = vpow.pop %v1645
      %v1647 = vmul.f32 %v1441, 1.442695
      %v1648 = vpow.pop %v1647
      %v1649 = vmul.f32 %v1443, 1.442695
      %v1650 = vpow.pop %v1649
      %v1651 = vmul.f32 %v1447, 1.442695
      %v1652 = vpow.pop %v1651
      %v1653 = vmul.f32 %v1449, 1.442695
      %v1654 = vpow.pop %v1653
      %v1655 = vmul.f32 %v1451, 1.442695
      %v1656 = vpow.pop %v1655
      %v1657 = vmul.f32 %v1453, 1.442695
      %v1658 = vpow.pop %v1657
      %v1659 = vmul.f32 %v1457, 1.442695
      %v1660 = vpow.pop %v1659
      %v1661 = vmul.f32 %v1459, 1.442695
      %v1662 = vpow.pop %v1661
      %v1663 = vmul.f32 %v1461, 1.442695
      %v1664 = vpow.pop %v1663
      %v1665 = vmul.f32 %v1463, 1.442695
      %v1666 = vpow.pop %v1665
      %v1667 = vmul.f32 %v1467, 1.442695
      %v1668 = vpow.pop %v1667
      %v1669 = vmul.f32 %v1469, 1.442695
      %v1670 = vpow.pop %v1669
      %v1671 = vmul.f32 %v1471, 1.442695
      %v1672 = vpow.pop %v1671
      %v1673 = vmul.f32 %v1473, 1.442695
      %v1674 = vpow.pop %v1673
      %v1675 = vmul.f32 %v1477, 1.442695
      %v1676 = vpow.pop %v1675
      %v1677 = vmul.f32 %v1479, 1.442695
      %v1678 = vpow.pop %v1677
      %v1679 = vmul.f32 %v1481, 1.442695
      %v1680 = vpow.pop %v1679
      %v1681 = vmul.f32 %v1483, 1.442695
      %v1682 = vpow.pop %v1681
      %v1683 = vmul.f32 %v1487, 1.442695
      %v1684 = vpow.pop %v1683
      %v1685 = vmul.f32 %v1489, 1.442695
      %v1686 = vpow.pop %v1685
      %v1687 = vmul.f32 %v1491, 1.442695
      %v1688 = vpow.pop %v1687
      %v1689 = vmul.f32 %v1493, 1.442695
      %v1690 = vpow.pop %v1689
      %v1691 = vmul.f32 %v1497, 1.442695
      %v1692 = vpow.pop %v1691
      %v1693 = vmul.f32 %v1499, 1.442695
      %v1694 = vpow.pop %v1693
      %v1695 = vmul.f32 %v1501, 1.442695
      %v1696 = vpow.pop %v1695
      %v1697 = vmul.f32 %v1503, 1.442695
      %v1698 = vpow.pop %v1697
      %v1699 = vmul.f32 %v1507, 1.442695
      %v1700 = vpow.pop %v1699
      %v1701 = vmul.f32 %v1509, 1.442695
      %v1702 = vpow.pop %v1701
      %v1703 = vmul.f32 %v1511, 1.442695
      %v1704 = vpow.pop %v1703
      %v1705 = vmul.f32 %v1513, 1.442695
      %v1706 = vpow.pop %v1705
      %v1707 = vsub.f32 %v1580, 1.0
      %v1708 = vsub.f32 %v1582, 1.0
      %v1709 = vsub.f32 %v1584, 1.0
      %v1710 = vsub.f32 %v1586, 1.0
      %v1711 = vsub.f32 %v1588, 1.0
      %v1712 = vsub.f32 %v1590, 1.0
      %v1713 = vsub.f32 %v1592, 1.0
      %v1714 = vsub.f32 %v1594, 1.0
      %v1715 = vsub.f32 %v1596, 1.0
      %v1716 = vsub.f32 %v1598, 1.0
      %v1717 = vsub.f32 %v1600, 1.0
      %v1718 = vsub.f32 %v1602, 1.0
      %v1719 = vsub.f32 %v1604, 1.0
      %v1720 = vsub.f32 %v1606, 1.0
      %v1721 = vsub.f32 %v1608, 1.0
      %v1722 = vsub.f32 %v1610, 1.0
      %v1723 = vsub.f32 %v1612, 1.0
      %v1724 = vsub.f32 %v1614, 1.0
      %v1725 = vsub.f32 %v1616, 1.0
      %v1726 = vsub.f32 %v1618, 1.0
      %v1727 = vsub.f32 %v1620, 1.0
      %v1728 = vsub.f32 %v1622, 1.0
      %v1729 = vsub.f32 %v1624, 1.0
      %v1730 = vsub.f32 %v1626, 1.0
      %v1731 = vsub.f32 %v1628, 1.0
      %v1732 = vsub.f32 %v1630, 1.0
      %v1733 = vsub.f32 %v1632, 1.0
      %v1734 = vsub.f32 %v1634, 1.0
      %v1735 = vsub.f32 %v1636, 1.0
      %v1736 = vsub.f32 %v1638, 1.0
      %v1737 = vsub.f32 %v1640, 1.0
      %v1738 = vsub.f32 %v1642, 1.0
      %v1739 = vsub.f32 %v1644, 1.0
      %v1740 = vsub.f32 %v1646, 1.0
      %v1741 = vsub.f32 %v1648, 1.0
      %v1742 = vsub.f32 %v1650, 1.0
      %v1743 = vsub.f32 %v1652, 1.0
      %v1744 = vsub.f32 %v1654, 1.0
      %v1745 = vsub.f32 %v1656, 1.0
      %v1746 = vsub.f32 %v1658, 1.0
      %v1747 = vsub.f32 %v1660, 1.0
      %v1748 = vsub.f32 %v1662, 1.0
      %v1749 = vsub.f32 %v1664, 1.0
      %v1750 = vsub.f32 %v1666, 1.0
      %v1751 = vsub.f32 %v1668, 1.0
      %v1752 = vsub.f32 %v1670, 1.0
      %v1753 = vsub.f32 %v1672, 1.0
      %v1754 = vsub.f32 %v1674, 1.0
      %v1755 = vsub.f32 %v1676, 1.0
      %v1756 = vsub.f32 %v1678, 1.0
      %v1757 = vsub.f32 %v1680, 1.0
      %v1758 = vsub.f32 %v1682, 1.0
      %v1759 = vsub.f32 %v1684, 1.0
      %v1760 = vsub.f32 %v1686, 1.0
      %v1761 = vsub.f32 %v1688, 1.0
      %v1762 = vsub.f32 %v1690, 1.0
      %v1763 = vsub.f32 %v1692, 1.0
      %v1764 = vsub.f32 %v1694, 1.0
      %v1765 = vsub.f32 %v1696, 1.0
      %v1766 = vsub.f32 %v1698, 1.0
      %v1767 = vsub.f32 %v1700, 1.0
      %v1768 = vsub.f32 %v1702, 1.0
      %v1769 = vsub.f32 %v1704, 1.0
      %v1770 = vsub.f32 %v1706, 1.0
      %v1771 = vsel %vm1515, %v1357, %v1707
      %v1772 = vsel %vm1516, %v1359, %v1708
      %v1773 = vsel %vm1517, %v1361, %v1709
      %v1774 = vsel %vm1518, %v1363, %v1710
      %v1775 = vsel %vm1519, %v1367, %v1711
      %v1776 = vsel %vm1520, %v1369, %v1712
      %v1777 = vsel %vm1521, %v1371, %v1713
      %v1778 = vsel %vm1522, %v1373, %v1714
      %v1779 = vsel %vm1523, %v1377, %v1715
      %v1780 = vsel %vm1524, %v1379, %v1716
      %v1781 = vsel %vm1525, %v1381, %v1717
      %v1782 = vsel %vm1526, %v1383, %v1718
      %v1783 = vsel %vm1527, %v1387, %v1719
      %v1784 = vsel %vm1528, %v1389, %v1720
      %v1785 = vsel %vm1529, %v1391, %v1721
      %v1786 = vsel %vm1530, %v1393, %v1722
      %v1787 = vsel %vm1531, %v1397, %v1723
      %v1788 = vsel %vm1532, %v1399, %v1724
      %v1789 = vsel %vm1533, %v1401, %v1725
      %v1790 = vsel %vm1534, %v1403, %v1726
      %v1791 = vsel %vm1535, %v1407, %v1727
      %v1792 = vsel %vm1536, %v1409, %v1728
      %v1793 = vsel %vm1537, %v1411, %v1729
      %v1794 = vsel %vm1538, %v1413, %v1730
      %v1795 = vsel %vm1539, %v1417, %v1731
      %v1796 = vsel %vm1540, %v1419, %v1732
      %v1797 = vsel %vm1541, %v1421, %v1733
      %v1798 = vsel %vm1542, %v1423, %v1734
      %v1799 = vsel %vm1543, %v1427, %v1735
      %v1800 = vsel %vm1544, %v1429, %v1736
      %v1801 = vsel %vm1545, %v1431, %v1737
      %v1802 = vsel %vm1546, %v1433, %v1738
      %v1803 = vsel %vm1547, %v1437, %v1739
      %v1804 = vsel %vm1548, %v1439, %v1740
      %v1805 = vsel %vm1549, %v1441, %v1741
      %v1806 = vsel %vm1550, %v1443, %v1742
      %v1807 = vsel %vm1551, %v1447, %v1743
      %v1808 = vsel %vm1552, %v1449, %v1744
      %v1809 = vsel %vm1553, %v1451, %v1745
      %v1810 = vsel %vm1554, %v1453, %v1746
      %v1811 = vsel %vm1555, %v1457, %v1747
      %v1812 = vsel %vm1556, %v1459, %v1748
      %v1813 = vsel %vm1557, %v1461, %v1749
      %v1814 = vsel %vm1558, %v1463, %v1750
      %v1815 = vsel %vm1559, %v1467, %v1751
      %v1816 = vsel %vm1560, %v1469, %v1752
      %v1817 = vsel %vm1561, %v1471, %v1753
      %v1818 = vsel %vm1562, %v1473, %v1754
      %v1819 = vsel %vm1563, %v1477, %v1755
      %v1820 = vsel %vm1564, %v1479, %v1756
      %v1821 = vsel %vm1565, %v1481, %v1757
      %v1822 = vsel %vm1566, %v1483, %v1758
      %v1823 = vsel %vm1567, %v1487, %v1759
      %v1824 = vsel %vm1568, %v1489, %v1760
      %v1825 = vsel %vm1569, %v1491, %v1761
      %v1826 = vsel %vm1570, %v1493, %v1762
      %v1827 = vsel %vm1571, %v1497, %v1763
      %v1828 = vsel %vm1572, %v1499, %v1764
      %v1829 = vsel %vm1573, %v1501, %v1765
      %v1830 = vsel %vm1574, %v1503, %v1766
      %v1831 = vsel %vm1575, %v1507, %v1767
      %v1832 = vsel %vm1576, %v1509, %v1768
      %v1833 = vsel %vm1577, %v1511, %v1769
      %v1834 = vsel %vm1578, %v1513, %v1770
      %v1835 = vpack.c.bf16 %v1773, %v1771
      %v1836 = vpack.c.bf16 %v1774, %v1772
      %v1837 = vpack.c.bf16 %v1777, %v1775
      %v1838 = vpack.c.bf16 %v1778, %v1776
      %v1839 = vpack.c.bf16 %v1781, %v1779
      %v1840 = vpack.c.bf16 %v1782, %v1780
      %v1841 = vpack.c.bf16 %v1785, %v1783
      %v1842 = vpack.c.bf16 %v1786, %v1784
      %v1843 = vpack.c.bf16 %v1789, %v1787
      %v1844 = vpack.c.bf16 %v1790, %v1788
      %v1845 = vpack.c.bf16 %v1793, %v1791
      %v1846 = vpack.c.bf16 %v1794, %v1792
      %v1847 = vpack.c.bf16 %v1797, %v1795
      %v1848 = vpack.c.bf16 %v1798, %v1796
      %v1849 = vpack.c.bf16 %v1801, %v1799
      %v1850 = vpack.c.bf16 %v1802, %v1800
      %v1851 = vpack.c.bf16 %v1805, %v1803
      %v1852 = vpack.c.bf16 %v1806, %v1804
      %v1853 = vpack.c.bf16 %v1809, %v1807
      %v1854 = vpack.c.bf16 %v1810, %v1808
      %v1855 = vpack.c.bf16 %v1813, %v1811
      %v1856 = vpack.c.bf16 %v1814, %v1812
      %v1857 = vpack.c.bf16 %v1817, %v1815
      %v1858 = vpack.c.bf16 %v1818, %v1816
      %v1859 = vpack.c.bf16 %v1821, %v1819
      %v1860 = vpack.c.bf16 %v1822, %v1820
      %v1861 = vpack.c.bf16 %v1825, %v1823
      %v1862 = vpack.c.bf16 %v1826, %v1824
      %v1863 = vpack.c.bf16 %v1829, %v1827
      %v1864 = vpack.c.bf16 %v1830, %v1828
      %v1865 = vpack.c.bf16 %v1833, %v1831
      %v1866 = vpack.c.bf16 %v1834, %v1832
      %v1867 = vld [vmem:[%s5] sm:$0xf]
      %v1868 = vld [vmem:[%s5 + $0x4] sm:$0xf]
      %v1869 = vld [vmem:[%s5 + $0x8] sm:$0xf]
      %v1870 = vld [vmem:[%s5 + $0xc] sm:$0xf]
      %v1871 = vld [vmem:[%s5 + $0x10] sm:$0xf]
      %v1872 = vld [vmem:[%s5 + $0x14] sm:$0xf]
      %v1873 = vld [vmem:[%s5 + $0x18] sm:$0xf]
      %v1874 = vld [vmem:[%s5 + $0x1c] sm:$0xf]
      %v1875 = vld [vmem:[%s5 + $0x20] sm:$0xf]
      %v1876 = vld [vmem:[%s5 + $0x24] sm:$0xf]
      %v1877 = vld [vmem:[%s5 + $0x28] sm:$0xf]
      %v1878 = vld [vmem:[%s5 + $0x2c] sm:$0xf]
      %v1879 = vld [vmem:[%s5 + $0x30] sm:$0xf]
      %v1880 = vld [vmem:[%s5 + $0x34] sm:$0xf]
      %v1881 = vld [vmem:[%s5 + $0x38] sm:$0xf]
      %v1882 = vld [vmem:[%s5 + $0x3c] sm:$0xf]
      %v1883 = vld [vmem:[%s5 + $0x40] sm:$0xf]
      %v1884 = vld [vmem:[%s5 + $0x44] sm:$0xf]
      %v1885 = vld [vmem:[%s5 + $0x48] sm:$0xf]
      %v1886 = vld [vmem:[%s5 + $0x4c] sm:$0xf]
      %v1887 = vld [vmem:[%s5 + $0x50] sm:$0xf]
      %v1888 = vld [vmem:[%s5 + $0x54] sm:$0xf]
      %v1889 = vld [vmem:[%s5 + $0x58] sm:$0xf]
      %v1890 = vld [vmem:[%s5 + $0x5c] sm:$0xf]
      %v1891 = vld [vmem:[%s5 + $0x60] sm:$0xf]
      %v1892 = vld [vmem:[%s5 + $0x64] sm:$0xf]
      %v1893 = vld [vmem:[%s5 + $0x68] sm:$0xf]
      %v1894 = vld [vmem:[%s5 + $0x6c] sm:$0xf]
      %v1895 = vld [vmem:[%s5 + $0x70] sm:$0xf]
      %v1896 = vld [vmem:[%s5 + $0x74] sm:$0xf]
      %v1897 = vld [vmem:[%s5 + $0x78] sm:$0xf]
      %v1898 = vld [vmem:[%s5 + $0x7c] sm:$0xf]
      %v1899 = vld [vmem:[%s6] sm:$0x1]
      %v1901 = vlaneseq
      %v1902 = vshrl.u32 %v1901, 7
      %v1903 = vsub.s32 0, %v1902
      %v1904 = vrot.slane %v1899, %v1903
      %v1938 = vunpack.c.l.b16 %v1867
      %v1939 = vunpack.c.l.b16 %v1868
      %v1940 = vunpack.c.l.b16 %v1869
      %v1941 = vunpack.c.l.b16 %v1870
      %v1942 = vunpack.c.l.b16 %v1871
      %v1943 = vunpack.c.l.b16 %v1872
      %v1944 = vunpack.c.l.b16 %v1873
      %v1945 = vunpack.c.l.b16 %v1874
      %v1946 = vunpack.c.l.b16 %v1875
      %v1947 = vunpack.c.l.b16 %v1876
      %v1948 = vunpack.c.l.b16 %v1877
      %v1949 = vunpack.c.l.b16 %v1878
      %v1950 = vunpack.c.l.b16 %v1879
      %v1951 = vunpack.c.l.b16 %v1880
      %v1952 = vunpack.c.l.b16 %v1881
      %v1953 = vunpack.c.l.b16 %v1882
      %v1954 = vunpack.c.l.b16 %v1883
      %v1955 = vunpack.c.l.b16 %v1884
      %v1956 = vunpack.c.l.b16 %v1885
      %v1957 = vunpack.c.l.b16 %v1886
      %v1958 = vunpack.c.l.b16 %v1887
      %v1959 = vunpack.c.l.b16 %v1888
      %v1960 = vunpack.c.l.b16 %v1889
      %v1961 = vunpack.c.l.b16 %v1890
      %v1962 = vunpack.c.l.b16 %v1891
      %v1963 = vunpack.c.l.b16 %v1892
      %v1964 = vunpack.c.l.b16 %v1893
      %v1965 = vunpack.c.l.b16 %v1894
      %v1966 = vunpack.c.l.b16 %v1895
      %v1967 = vunpack.c.l.b16 %v1896
      %v1968 = vunpack.c.l.b16 %v1897
      %v1969 = vunpack.c.l.b16 %v1898
      %v1970 = vpack.c.b16 %v1939, %v1938
      %v1971 = vpack.c.b16 %v1941, %v1940
      %v1972 = vpack.c.b16 %v1943, %v1942
      %v1973 = vpack.c.b16 %v1945, %v1944
      %v1974 = vpack.c.b16 %v1947, %v1946
      %v1975 = vpack.c.b16 %v1949, %v1948
      %v1976 = vpack.c.b16 %v1951, %v1950
      %v1977 = vpack.c.b16 %v1953, %v1952
      %v1978 = vpack.c.b16 %v1955, %v1954
      %v1979 = vpack.c.b16 %v1957, %v1956
      %v1980 = vpack.c.b16 %v1959, %v1958
      %v1981 = vpack.c.b16 %v1961, %v1960
      %v1982 = vpack.c.b16 %v1963, %v1962
      %v1983 = vpack.c.b16 %v1965, %v1964
      %v1984 = vpack.c.b16 %v1967, %v1966
      %v1985 = vpack.c.b16 %v1969, %v1968
      %2002 = vmatprep.subr.bf16.mxu0 0
      %2003 = vmatpush1.bf16.msra.mxu0 %v1977
      %2004 = vmatprep.subr.bf16.mxu0 0
      %2005 = vmatpush1.bf16.msra.mxu0 %v1976
      %2006 = vmatprep.subr.bf16.mxu0 0
      %2007 = vmatpush1.bf16.msra.mxu0 %v1975
      %2008 = vmatprep.subr.bf16.mxu0 0
      %2009 = vmatpush1.bf16.msra.mxu0 %v1974
      %2010 = vmatprep.subr.bf16.mxu0 0
      %2011 = vmatpush1.bf16.msra.mxu0 %v1973
      %2012 = vmatprep.subr.bf16.mxu0 0
      %2013 = vmatpush1.bf16.msra.mxu0 %v1972
      %2014 = vmatprep.subr.bf16.mxu0 0
      %2015 = vmatpush1.bf16.msra.mxu0 %v1971
      %2016 = vmatprep.subr.bf16.mxu0 0
      %2017 = vmatpush1.bf16.msra.mxu0 %v1970
      %2018 = vmatprep.subr.bf16.mxu0 0
      %2019 = vmatpush2.bf16.msra.mxu0 %v1985
      %2020 = vmatprep.subr.bf16.mxu0 0
      %2021 = vmatpush2.bf16.msra.mxu0 %v1984
      %2022 = vmatprep.subr.bf16.mxu0 0
      %2023 = vmatpush2.bf16.msra.mxu0 %v1983
      %2024 = vmatprep.subr.bf16.mxu0 0
      %2025 = vmatpush2.bf16.msra.mxu0 %v1982
      %2026 = vmatprep.subr.bf16.mxu0 0
      %2027 = vmatpush2.bf16.msra.mxu0 %v1981
      %2028 = vmatprep.subr.bf16.mxu0 0
      %2029 = vmatpush2.bf16.msra.mxu0 %v1980
      %2030 = vmatprep.subr.bf16.mxu0 0
      %2031 = vmatpush2.bf16.msra.mxu0 %v1979
      %2032 = vmatprep.subr.bf16.mxu0 0
      %2033 = vmatpush2.bf16.msra.mxu0 %v1978
      %2034 = vmatprep.mubr.bf16.mxu0 %v1836
      %2035 = vmatmul.mubr.bf16.gmra.mxu0 %v1835
      %v2036 = vpop.f32.mrf.mxu0
      %v2037 = vadd.f32 %v1904, %v2036
      %v2038 = vpop.f32.mrf.mxu0
      %v2039 = vpop.f32.mrf.mxu0
      %v2040 = vadd.f32 %v1904, %v2039
      %v2041 = vpop.f32.mrf.mxu0
      %2042 = vmatprep.mubr.bf16.mxu0 %v1838
      %2043 = vmatmul.mubr.bf16.gmra.mxu0 %v1837
      %v2044 = vpop.f32.mrf.mxu0
      %v2045 = vadd.f32 %v1904, %v2044
      %v2046 = vpop.f32.mrf.mxu0
      %v2047 = vpop.f32.mrf.mxu0
      %v2048 = vadd.f32 %v1904, %v2047
      %v2049 = vpop.f32.mrf.mxu0
      %2050 = vmatprep.mubr.bf16.mxu0 %v1840
      %2051 = vmatmul.mubr.bf16.gmra.mxu0 %v1839
      %v2052 = vpop.f32.mrf.mxu0
      %v2053 = vadd.f32 %v1904, %v2052
      %v2054 = vpop.f32.mrf.mxu0
      %v2055 = vpop.f32.mrf.mxu0
      %v2056 = vadd.f32 %v1904, %v2055
      %v2057 = vpop.f32.mrf.mxu0
      %2058 = vmatprep.mubr.bf16.mxu0 %v1842
      %2059 = vmatmul.mubr.bf16.gmra.mxu0 %v1841
      %v2060 = vpop.f32.mrf.mxu0
      %v2061 = vadd.f32 %v1904, %v2060
      %v2062 = vpop.f32.mrf.mxu0
      %v2063 = vpop.f32.mrf.mxu0
      %v2064 = vadd.f32 %v1904, %v2063
      %v2065 = vpop.f32.mrf.mxu0
      %2066 = vmatprep.mubr.bf16.mxu0 %v1844
      %2067 = vmatmul.mubr.bf16.gmra.mxu0 %v1843
      %v2068 = vpop.f32.mrf.mxu0
      %v2069 = vadd.f32 %v1904, %v2068
      %v2070 = vpop.f32.mrf.mxu0
      %v2071 = vpop.f32.mrf.mxu0
      %v2072 = vadd.f32 %v1904, %v2071
      %v2073 = vpop.f32.mrf.mxu0
      %2074 = vmatprep.mubr.bf16.mxu0 %v1846
      %2075 = vmatmul.mubr.bf16.gmra.mxu0 %v1845
      %v2076 = vpop.f32.mrf.mxu0
      %v2077 = vadd.f32 %v1904, %v2076
      %v2078 = vpop.f32.mrf.mxu0
      %v2079 = vpop.f32.mrf.mxu0
      %v2080 = vadd.f32 %v1904, %v2079
      %v2081 = vpop.f32.mrf.mxu0
      %2082 = vmatprep.mubr.bf16.mxu0 %v1848
      %2083 = vmatmul.mubr.bf16.gmra.mxu0 %v1847
      %v2084 = vpop.f32.mrf.mxu0
      %v2085 = vadd.f32 %v1904, %v2084
      %v2086 = vpop.f32.mrf.mxu0
      %v2087 = vpop.f32.mrf.mxu0
      %v2088 = vadd.f32 %v1904, %v2087
      %v2089 = vpop.f32.mrf.mxu0
      %2090 = vmatprep.mubr.bf16.mxu0 %v1850
      %2091 = vmatmul.mubr.bf16.gmra.mxu0 %v1849
      %v2092 = vpop.f32.mrf.mxu0
      %v2093 = vadd.f32 %v1904, %v2092
      %v2094 = vpop.f32.mrf.mxu0
      %v2095 = vpop.f32.mrf.mxu0
      %v2096 = vadd.f32 %v1904, %v2095
      %v2097 = vpop.f32.mrf.mxu0
      %2098 = vmatprep.mubr.bf16.mxu0 %v1852
      %2099 = vmatmul.mubr.bf16.gmra.mxu0 %v1851
      %v2100 = vpop.f32.mrf.mxu0
      %v2101 = vadd.f32 %v1904, %v2100
      %v2102 = vpop.f32.mrf.mxu0
      %v2103 = vpop.f32.mrf.mxu0
      %v2104 = vadd.f32 %v1904, %v2103
      %v2105 = vpop.f32.mrf.mxu0
      %2106 = vmatprep.mubr.bf16.mxu0 %v1854
      %2107 = vmatmul.mubr.bf16.gmra.mxu0 %v1853
      %v2108 = vpop.f32.mrf.mxu0
      %v2109 = vadd.f32 %v1904, %v2108
      %v2110 = vpop.f32.mrf.mxu0
      %v2111 = vpop.f32.mrf.mxu0
      %v2112 = vadd.f32 %v1904, %v2111
      %v2113 = vpop.f32.mrf.mxu0
      %2114 = vmatprep.mubr.bf16.mxu0 %v1856
      %2115 = vmatmul.mubr.bf16.gmra.mxu0 %v1855
      %v2116 = vpop.f32.mrf.mxu0
      %v2117 = vadd.f32 %v1904, %v2116
      %v2118 = vpop.f32.mrf.mxu0
      %v2119 = vpop.f32.mrf.mxu0
      %v2120 = vadd.f32 %v1904, %v2119
      %v2121 = vpop.f32.mrf.mxu0
      %2122 = vmatprep.mubr.bf16.mxu0 %v1858
      %2123 = vmatmul.mubr.bf16.gmra.mxu0 %v1857
      %v2124 = vpop.f32.mrf.mxu0
      %v2125 = vadd.f32 %v1904, %v2124
      %v2126 = vpop.f32.mrf.mxu0
      %v2127 = vpop.f32.mrf.mxu0
      %v2128 = vadd.f32 %v1904, %v2127
      %v2129 = vpop.f32.mrf.mxu0
      %2130 = vmatprep.mubr.bf16.mxu0 %v1860
      %2131 = vmatmul.mubr.bf16.gmra.mxu0 %v1859
      %v2132 = vpop.f32.mrf.mxu0
      %v2133 = vadd.f32 %v1904, %v2132
      %v2134 = vpop.f32.mrf.mxu0
      %v2135 = vpop.f32.mrf.mxu0
      %v2136 = vadd.f32 %v1904, %v2135
      %v2137 = vpop.f32.mrf.mxu0
      %2138 = vmatprep.mubr.bf16.mxu0 %v1862
      %2139 = vmatmul.mubr.bf16.gmra.mxu0 %v1861
      %v2140 = vpop.f32.mrf.mxu0
      %v2141 = vadd.f32 %v1904, %v2140
      %v2142 = vpop.f32.mrf.mxu0
      %v2143 = vpop.f32.mrf.mxu0
      %v2144 = vadd.f32 %v1904, %v2143
      %v2145 = vpop.f32.mrf.mxu0
      %2146 = vmatprep.mubr.bf16.mxu0 %v1864
      %2147 = vmatmul.mubr.bf16.gmra.mxu0 %v1863
      %v2148 = vpop.f32.mrf.mxu0
      %v2149 = vadd.f32 %v1904, %v2148
      %v2150 = vpop.f32.mrf.mxu0
      %v2151 = vpop.f32.mrf.mxu0
      %v2152 = vadd.f32 %v1904, %v2151
      %v2153 = vpop.f32.mrf.mxu0
      %2154 = vmatprep.mubr.bf16.mxu0 %v1866
      %2155 = vmatmul.mubr.bf16.gmra.mxu0 %v1865
      %v2156 = vpop.f32.mrf.mxu0
      %v2157 = vadd.f32 %v1904, %v2156
      %v2158 = vpop.f32.mrf.mxu0
      %v2159 = vpop.f32.mrf.mxu0
      %v2160 = vadd.f32 %v1904, %v2159
      %v2161 = vpop.f32.mrf.mxu0
      %2162 = vdwg.mxu0
      %vm2163 = vcmp.gt.f32.partialorder %v2037, 0.0
      %vm2164 = vcmp.gt.f32.partialorder %v2040, 0.0
      %vm2165 = vcmp.gt.f32.partialorder %v2045, 0.0
      %vm2166 = vcmp.gt.f32.partialorder %v2048, 0.0
      %vm2167 = vcmp.gt.f32.partialorder %v2053, 0.0
      %vm2168 = vcmp.gt.f32.partialorder %v2056, 0.0
      %vm2169 = vcmp.gt.f32.partialorder %v2061, 0.0
      %vm2170 = vcmp.gt.f32.partialorder %v2064, 0.0
      %vm2171 = vcmp.gt.f32.partialorder %v2069, 0.0
      %vm2172 = vcmp.gt.f32.partialorder %v2072, 0.0
      %vm2173 = vcmp.gt.f32.partialorder %v2077, 0.0
      %vm2174 = vcmp.gt.f32.partialorder %v2080, 0.0
      %vm2175 = vcmp.gt.f32.partialorder %v2085, 0.0
      %vm2176 = vcmp.gt.f32.partialorder %v2088, 0.0
      %vm2177 = vcmp.gt.f32.partialorder %v2093, 0.0
      %vm2178 = vcmp.gt.f32.partialorder %v2096, 0.0
      %vm2179 = vcmp.gt.f32.partialorder %v2101, 0.0
      %vm2180 = vcmp.gt.f32.partialorder %v2104, 0.0
      %vm2181 = vcmp.gt.f32.partialorder %v2109, 0.0
      %vm2182 = vcmp.gt.f32.partialorder %v2112, 0.0
      %vm2183 = vcmp.gt.f32.partialorder %v2117, 0.0
      %vm2184 = vcmp.gt.f32.partialorder %v2120, 0.0
      %vm2185 = vcmp.gt.f32.partialorder %v2125, 0.0
      %vm2186 = vcmp.gt.f32.partialorder %v2128, 0.0
      %vm2187 = vcmp.gt.f32.partialorder %v2133, 0.0
      %vm2188 = vcmp.gt.f32.partialorder %v2136, 0.0
      %vm2189 = vcmp.gt.f32.partialorder %v2141, 0.0
      %vm2190 = vcmp.gt.f32.partialorder %v2144, 0.0
      %vm2191 = vcmp.gt.f32.partialorder %v2149, 0.0
      %vm2192 = vcmp.gt.f32.partialorder %v2152, 0.0
      %vm2193 = vcmp.gt.f32.partialorder %v2157, 0.0
      %vm2194 = vcmp.gt.f32.partialorder %v2160, 0.0
      %v2195 = vmul.f32 %v2037, 1.442695
      %v2196 = vpow.pop %v2195
      %v2197 = vmul.f32 %v2040, 1.442695
      %v2198 = vpow.pop %v2197
      %v2199 = vmul.f32 %v2045, 1.442695
      %v2200 = vpow.pop %v2199
      %v2201 = vmul.f32 %v2048, 1.442695
      %v2202 = vpow.pop %v2201
      %v2203 = vmul.f32 %v2053, 1.442695
      %v2204 = vpow.pop %v2203
      %v2205 = vmul.f32 %v2056, 1.442695
      %v2206 = vpow.pop %v2205
      %v2207 = vmul.f32 %v2061, 1.442695
      %v2208 = vpow.pop %v2207
      %v2209 = vmul.f32 %v2064, 1.442695
      %v2210 = vpow.pop %v2209
      %v2211 = vmul.f32 %v2069, 1.442695
      %v2212 = vpow.pop %v2211
      %v2213 = vmul.f32 %v2072, 1.442695
      %v2214 = vpow.pop %v2213
      %v2215 = vmul.f32 %v2077, 1.442695
      %v2216 = vpow.pop %v2215
      %v2217 = vmul.f32 %v2080, 1.442695
      %v2218 = vpow.pop %v2217
      %v2219 = vmul.f32 %v2085, 1.442695
      %v2220 = vpow.pop %v2219
      %v2221 = vmul.f32 %v2088, 1.442695
      %v2222 = vpow.pop %v2221
      %v2223 = vmul.f32 %v2093, 1.442695
      %v2224 = vpow.pop %v2223
      %v2225 = vmul.f32 %v2096, 1.442695
      %v2226 = vpow.pop %v2225
      %v2227 = vmul.f32 %v2101, 1.442695
      %v2228 = vpow.pop %v2227
      %v2229 = vmul.f32 %v2104, 1.442695
      %v2230 = vpow.pop %v2229
      %v2231 = vmul.f32 %v2109, 1.442695
      %v2232 = vpow.pop %v2231
      %v2233 = vmul.f32 %v2112, 1.442695
      %v2234 = vpow.pop %v2233
      %v2235 = vmul.f32 %v2117, 1.442695
      %v2236 = vpow.pop %v2235
      %v2237 = vmul.f32 %v2120, 1.442695
      %v2238 = vpow.pop %v2237
      %v2239 = vmul.f32 %v2125, 1.442695
      %v2240 = vpow.pop %v2239
      %v2241 = vmul.f32 %v2128, 1.442695
      %v2242 = vpow.pop %v2241
      %v2243 = vmul.f32 %v2133, 1.442695
      %v2244 = vpow.pop %v2243
      %v2245 = vmul.f32 %v2136, 1.442695
      %v2246 = vpow.pop %v2245
      %v2247 = vmul.f32 %v2141, 1.442695
      %v2248 = vpow.pop %v2247
      %v2249 = vmul.f32 %v2144, 1.442695
      %v2250 = vpow.pop %v2249
      %v2251 = vmul.f32 %v2149, 1.442695
      %v2252 = vpow.pop %v2251
      %v2253 = vmul.f32 %v2152, 1.442695
      %v2254 = vpow.pop %v2253
      %v2255 = vmul.f32 %v2157, 1.442695
      %v2256 = vpow.pop %v2255
      %v2257 = vmul.f32 %v2160, 1.442695
      %v2258 = vpow.pop %v2257
      %v2259 = vsub.f32 %v2196, 1.0
      %v2260 = vsub.f32 %v2198, 1.0
      %v2261 = vsub.f32 %v2200, 1.0
      %v2262 = vsub.f32 %v2202, 1.0
      %v2263 = vsub.f32 %v2204, 1.0
      %v2264 = vsub.f32 %v2206, 1.0
      %v2265 = vsub.f32 %v2208, 1.0
      %v2266 = vsub.f32 %v2210, 1.0
      %v2267 = vsub.f32 %v2212, 1.0
      %v2268 = vsub.f32 %v2214, 1.0
      %v2269 = vsub.f32 %v2216, 1.0
      %v2270 = vsub.f32 %v2218, 1.0
      %v2271 = vsub.f32 %v2220, 1.0
      %v2272 = vsub.f32 %v2222, 1.0
      %v2273 = vsub.f32 %v2224, 1.0
      %v2274 = vsub.f32 %v2226, 1.0
      %v2275 = vsub.f32 %v2228, 1.0
      %v2276 = vsub.f32 %v2230, 1.0
      %v2277 = vsub.f32 %v2232, 1.0
      %v2278 = vsub.f32 %v2234, 1.0
      %v2279 = vsub.f32 %v2236, 1.0
      %v2280 = vsub.f32 %v2238, 1.0
      %v2281 = vsub.f32 %v2240, 1.0
      %v2282 = vsub.f32 %v2242, 1.0
      %v2283 = vsub.f32 %v2244, 1.0
      %v2284 = vsub.f32 %v2246, 1.0
      %v2285 = vsub.f32 %v2248, 1.0
      %v2286 = vsub.f32 %v2250, 1.0
      %v2287 = vsub.f32 %v2252, 1.0
      %v2288 = vsub.f32 %v2254, 1.0
      %v2289 = vsub.f32 %v2256, 1.0
      %v2290 = vsub.f32 %v2258, 1.0
      %v2291 = vsel %vm2163, %v2037, %v2259
      %v2292 = vsel %vm2164, %v2040, %v2260
      %v2293 = vsel %vm2165, %v2045, %v2261
      %v2294 = vsel %vm2166, %v2048, %v2262
      %v2295 = vsel %vm2167, %v2053, %v2263
      %v2296 = vsel %vm2168, %v2056, %v2264
      %v2297 = vsel %vm2169, %v2061, %v2265
      %v2298 = vsel %vm2170, %v2064, %v2266
      %v2299 = vsel %vm2171, %v2069, %v2267
      %v2300 = vsel %vm2172, %v2072, %v2268
      %v2301 = vsel %vm2173, %v2077, %v2269
      %v2302 = vsel %vm2174, %v2080, %v2270
      %v2303 = vsel %vm2175, %v2085, %v2271
      %v2304 = vsel %vm2176, %v2088, %v2272
      %v2305 = vsel %vm2177, %v2093, %v2273
      %v2306 = vsel %vm2178, %v2096, %v2274
      %v2307 = vsel %vm2179, %v2101, %v2275
      %v2308 = vsel %vm2180, %v2104, %v2276
      %v2309 = vsel %vm2181, %v2109, %v2277
      %v2310 = vsel %vm2182, %v2112, %v2278
      %v2311 = vsel %vm2183, %v2117, %v2279
      %v2312 = vsel %vm2184, %v2120, %v2280
      %v2313 = vsel %vm2185, %v2125, %v2281
      %v2314 = vsel %vm2186, %v2128, %v2282
      %v2315 = vsel %vm2187, %v2133, %v2283
      %v2316 = vsel %vm2188, %v2136, %v2284
      %v2317 = vsel %vm2189, %v2141, %v2285
      %v2318 = vsel %vm2190, %v2144, %v2286
      %v2319 = vsel %vm2191, %v2149, %v2287
      %v2320 = vsel %vm2192, %v2152, %v2288
      %v2321 = vsel %vm2193, %v2157, %v2289
      %v2322 = vsel %vm2194, %v2160, %v2290
      %v2323 = vpack.c.bf16 %v2292, %v2291
      %v2324 = vpack.c.bf16 %v2294, %v2293
      %v2325 = vpack.c.bf16 %v2296, %v2295
      %v2326 = vpack.c.bf16 %v2298, %v2297
      %v2327 = vpack.c.bf16 %v2300, %v2299
      %v2328 = vpack.c.bf16 %v2302, %v2301
      %v2329 = vpack.c.bf16 %v2304, %v2303
      %v2330 = vpack.c.bf16 %v2306, %v2305
      %v2331 = vpack.c.bf16 %v2308, %v2307
      %v2332 = vpack.c.bf16 %v2310, %v2309
      %v2333 = vpack.c.bf16 %v2312, %v2311
      %v2334 = vpack.c.bf16 %v2314, %v2313
      %v2335 = vpack.c.bf16 %v2316, %v2315
      %v2336 = vpack.c.bf16 %v2318, %v2317
      %v2337 = vpack.c.bf16 %v2320, %v2319
      %v2338 = vpack.c.bf16 %v2322, %v2321
      %v2339 = vld [vmem:[%s7] sm:$0xf]
      %v2340 = vld [vmem:[%s7 + $0x4] sm:$0xf]
      %v2341 = vld [vmem:[%s7 + $0x8] sm:$0xf]
      %v2342 = vld [vmem:[%s7 + $0xc] sm:$0xf]
      %v2343 = vld [vmem:[%s7 + $0x10] sm:$0xf]
      %v2344 = vld [vmem:[%s7 + $0x14] sm:$0xf]
      %v2345 = vld [vmem:[%s7 + $0x18] sm:$0xf]
      %v2346 = vld [vmem:[%s7 + $0x1c] sm:$0xf]
      %v2347 = vld [vmem:[%s7 + $0x20] sm:$0xf]
      %v2348 = vld [vmem:[%s7 + $0x24] sm:$0xf]
      %v2349 = vld [vmem:[%s7 + $0x28] sm:$0xf]
      %v2350 = vld [vmem:[%s7 + $0x2c] sm:$0xf]
      %v2351 = vld [vmem:[%s7 + $0x30] sm:$0xf]
      %v2352 = vld [vmem:[%s7 + $0x34] sm:$0xf]
      %v2353 = vld [vmem:[%s7 + $0x38] sm:$0xf]
      %v2354 = vld [vmem:[%s7 + $0x3c] sm:$0xf]
      %v2355 = vld [vmem:[%s8] sm:$0x1]
      %v2357 = vlaneseq
      %v2358 = vshrl.u32 %v2357, 7
      %v2359 = vsub.s32 0, %v2358
      %v2360 = vrot.slane %v2355, %v2359
      %v2378 = vunpack.c.l.b16 %v2339
      %v2379 = vunpack.c.l.b16 %v2340
      %v2380 = vunpack.c.l.b16 %v2341
      %v2381 = vunpack.c.l.b16 %v2342
      %v2382 = vunpack.c.l.b16 %v2343
      %v2383 = vunpack.c.l.b16 %v2344
      %v2384 = vunpack.c.l.b16 %v2345
      %v2385 = vunpack.c.l.b16 %v2346
      %v2386 = vunpack.c.l.b16 %v2347
      %v2387 = vunpack.c.l.b16 %v2348
      %v2388 = vunpack.c.l.b16 %v2349
      %v2389 = vunpack.c.l.b16 %v2350
      %v2390 = vunpack.c.l.b16 %v2351
      %v2391 = vunpack.c.l.b16 %v2352
      %v2392 = vunpack.c.l.b16 %v2353
      %v2393 = vunpack.c.l.b16 %v2354
      %v2394 = vpack.c.b16 %v2379, %v2378
      %v2395 = vpack.c.b16 %v2381, %v2380
      %v2396 = vpack.c.b16 %v2383, %v2382
      %v2397 = vpack.c.b16 %v2385, %v2384
      %v2398 = vpack.c.b16 %v2387, %v2386
      %v2399 = vpack.c.b16 %v2389, %v2388
      %v2400 = vpack.c.b16 %v2391, %v2390
      %v2401 = vpack.c.b16 %v2393, %v2392
      %2410 = vmatprep.subr.bf16.mxu0 0
      %2411 = vmatpush1.bf16.msra.mxu0 %v2401
      %2412 = vmatprep.subr.bf16.mxu0 0
      %2413 = vmatpush1.bf16.msra.mxu0 %v2400
      %2414 = vmatprep.subr.bf16.mxu0 0
      %2415 = vmatpush1.bf16.msra.mxu0 %v2399
      %2416 = vmatprep.subr.bf16.mxu0 0
      %2417 = vmatpush1.bf16.msra.mxu0 %v2398
      %2418 = vmatprep.subr.bf16.mxu0 0
      %2419 = vmatpush1.bf16.msra.mxu0 %v2397
      %2420 = vmatprep.subr.bf16.mxu0 0
      %2421 = vmatpush1.bf16.msra.mxu0 %v2396
      %2422 = vmatprep.subr.bf16.mxu0 0
      %2423 = vmatpush1.bf16.msra.mxu0 %v2395
      %2424 = vmatprep.subr.bf16.mxu0 0
      %2425 = vmatpush1.bf16.msra.mxu0 %v2394
      %2426 = vmatprep.subr.bf16.mxu0 0
      %2427 = vmatpush2.bf16.msra.mxu0 0
      %2428 = vmatprep.subr.bf16.mxu0 0
      %2429 = vmatpush2.bf16.msra.mxu0 0
      %2430 = vmatprep.subr.bf16.mxu0 0
      %2431 = vmatpush2.bf16.msra.mxu0 0
      %2432 = vmatprep.subr.bf16.mxu0 0
      %2433 = vmatpush2.bf16.msra.mxu0 0
      %2434 = vmatprep.subr.bf16.mxu0 0
      %2435 = vmatpush2.bf16.msra.mxu0 0
      %2436 = vmatprep.subr.bf16.mxu0 0
      %2437 = vmatpush2.bf16.msra.mxu0 0
      %2438 = vmatprep.subr.bf16.mxu0 0
      %2439 = vmatpush2.bf16.msra.mxu0 0
      %2440 = vmatprep.subr.bf16.mxu0 0
      %2441 = vmatpush2.bf16.msra.mxu0 0
      %2442 = vmatprep.mubr.bf16.mxu0 0
      %2443 = vmatmul.mubr.bf16.gmra.mxu0 %v2323
      %v2444 = vpop.f32.mrf.mxu0
      %v2445 = vadd.f32 %v2360, %v2444
      %v2446 = vpop.f32.mrf.mxu0
      %v2447 = vpop.f32.mrf.mxu0
      %v2448 = vadd.f32 %v2360, %v2447
      %v2449 = vpop.f32.mrf.mxu0
      %2450 = vmatprep.mubr.bf16.mxu0 0
      %2451 = vmatmul.mubr.bf16.gmra.mxu0 %v2324
      %v2452 = vpop.f32.mrf.mxu0
      %v2453 = vadd.f32 %v2360, %v2452
      %v2454 = vpop.f32.mrf.mxu0
      %v2455 = vpop.f32.mrf.mxu0
      %v2456 = vadd.f32 %v2360, %v2455
      %v2457 = vpop.f32.mrf.mxu0
      %2458 = vmatprep.mubr.bf16.mxu0 0
      %2459 = vmatmul.mubr.bf16.gmra.mxu0 %v2325
      %v2460 = vpop.f32.mrf.mxu0
      %v2461 = vadd.f32 %v2360, %v2460
      %v2462 = vpop.f32.mrf.mxu0
      %v2463 = vpop.f32.mrf.mxu0
      %v2464 = vadd.f32 %v2360, %v2463
      %v2465 = vpop.f32.mrf.mxu0
      %2466 = vmatprep.mubr.bf16.mxu0 0
      %2467 = vmatmul.mubr.bf16.gmra.mxu0 %v2326
      %v2468 = vpop.f32.mrf.mxu0
      %v2469 = vadd.f32 %v2360, %v2468
      %v2470 = vpop.f32.mrf.mxu0
      %v2471 = vpop.f32.mrf.mxu0
      %v2472 = vadd.f32 %v2360, %v2471
      %v2473 = vpop.f32.mrf.mxu0
      %2474 = vmatprep.mubr.bf16.mxu0 0
      %2475 = vmatmul.mubr.bf16.gmra.mxu0 %v2327
      %v2476 = vpop.f32.mrf.mxu0
      %v2477 = vadd.f32 %v2360, %v2476
      %v2478 = vpop.f32.mrf.mxu0
      %v2479 = vpop.f32.mrf.mxu0
      %v2480 = vadd.f32 %v2360, %v2479
      %v2481 = vpop.f32.mrf.mxu0
      %2482 = vmatprep.mubr.bf16.mxu0 0
      %2483 = vmatmul.mubr.bf16.gmra.mxu0 %v2328
      %v2484 = vpop.f32.mrf.mxu0
      %v2485 = vadd.f32 %v2360, %v2484
      %v2486 = vpop.f32.mrf.mxu0
      %v2487 = vpop.f32.mrf.mxu0
      %v2488 = vadd.f32 %v2360, %v2487
      %v2489 = vpop.f32.mrf.mxu0
      %2490 = vmatprep.mubr.bf16.mxu0 0
      %2491 = vmatmul.mubr.bf16.gmra.mxu0 %v2329
      %v2492 = vpop.f32.mrf.mxu0
      %v2493 = vadd.f32 %v2360, %v2492
      %v2494 = vpop.f32.mrf.mxu0
      %v2495 = vpop.f32.mrf.mxu0
      %v2496 = vadd.f32 %v2360, %v2495
      %v2497 = vpop.f32.mrf.mxu0
      %2498 = vmatprep.mubr.bf16.mxu0 0
      %2499 = vmatmul.mubr.bf16.gmra.mxu0 %v2330
      %v2500 = vpop.f32.mrf.mxu0
      %v2501 = vadd.f32 %v2360, %v2500
      %v2502 = vpop.f32.mrf.mxu0
      %v2503 = vpop.f32.mrf.mxu0
      %v2504 = vadd.f32 %v2360, %v2503
      %v2505 = vpop.f32.mrf.mxu0
      %2506 = vmatprep.mubr.bf16.mxu0 0
      %2507 = vmatmul.mubr.bf16.gmra.mxu0 %v2331
      %v2508 = vpop.f32.mrf.mxu0
      %v2509 = vadd.f32 %v2360, %v2508
      %v2510 = vpop.f32.mrf.mxu0
      %v2511 = vpop.f32.mrf.mxu0
      %v2512 = vadd.f32 %v2360, %v2511
      %v2513 = vpop.f32.mrf.mxu0
      %2514 = vmatprep.mubr.bf16.mxu0 0
      %2515 = vmatmul.mubr.bf16.gmra.mxu0 %v2332
      %v2516 = vpop.f32.mrf.mxu0
      %v2517 = vadd.f32 %v2360, %v2516
      %v2518 = vpop.f32.mrf.mxu0
      %v2519 = vpop.f32.mrf.mxu0
      %v2520 = vadd.f32 %v2360, %v2519
      %v2521 = vpop.f32.mrf.mxu0
      %2522 = vmatprep.mubr.bf16.mxu0 0
      %2523 = vmatmul.mubr.bf16.gmra.mxu0 %v2333
      %v2524 = vpop.f32.mrf.mxu0
      %v2525 = vadd.f32 %v2360, %v2524
      %v2526 = vpop.f32.mrf.mxu0
      %v2527 = vpop.f32.mrf.mxu0
      %v2528 = vadd.f32 %v2360, %v2527
      %v2529 = vpop.f32.mrf.mxu0
      %2530 = vmatprep.mubr.bf16.mxu0 0
      %2531 = vmatmul.mubr.bf16.gmra.mxu0 %v2334
      %v2532 = vpop.f32.mrf.mxu0
      %v2533 = vadd.f32 %v2360, %v2532
      %v2534 = vpop.f32.mrf.mxu0
      %v2535 = vpop.f32.mrf.mxu0
      %v2536 = vadd.f32 %v2360, %v2535
      %v2537 = vpop.f32.mrf.mxu0
      %2538 = vmatprep.mubr.bf16.mxu0 0
      %2539 = vmatmul.mubr.bf16.gmra.mxu0 %v2335
      %v2540 = vpop.f32.mrf.mxu0
      %v2541 = vadd.f32 %v2360, %v2540
      %v2542 = vpop.f32.mrf.mxu0
      %v2543 = vpop.f32.mrf.mxu0
      %v2544 = vadd.f32 %v2360, %v2543
      %v2545 = vpop.f32.mrf.mxu0
      %2546 = vmatprep.mubr.bf16.mxu0 0
      %2547 = vmatmul.mubr.bf16.gmra.mxu0 %v2336
      %v2548 = vpop.f32.mrf.mxu0
      %v2549 = vadd.f32 %v2360, %v2548
      %v2550 = vpop.f32.mrf.mxu0
      %v2551 = vpop.f32.mrf.mxu0
      %v2552 = vadd.f32 %v2360, %v2551
      %v2553 = vpop.f32.mrf.mxu0
      %2554 = vmatprep.mubr.bf16.mxu0 0
      %2555 = vmatmul.mubr.bf16.gmra.mxu0 %v2337
      %v2556 = vpop.f32.mrf.mxu0
      %v2557 = vadd.f32 %v2360, %v2556
      %v2558 = vpop.f32.mrf.mxu0
      %v2559 = vpop.f32.mrf.mxu0
      %v2560 = vadd.f32 %v2360, %v2559
      %v2561 = vpop.f32.mrf.mxu0
      %2562 = vmatprep.mubr.bf16.mxu0 0
      %2563 = vmatmul.mubr.bf16.gmra.mxu0 %v2338
      %v2564 = vpop.f32.mrf.mxu0
      %v2565 = vadd.f32 %v2360, %v2564
      %v2566 = vpop.f32.mrf.mxu0
      %v2567 = vpop.f32.mrf.mxu0
      %v2568 = vadd.f32 %v2360, %v2567
      %v2569 = vpop.f32.mrf.mxu0
      %2570 = vdwg.mxu0
      %2571 = vst [vmem:[%s334] sm:$0xff] %v2445
      %2572 = vst [vmem:[%s334 + $0x8] sm:$0xff] %v2448
      %2573 = vst [vmem:[%s334 + $0x10] sm:$0xff] %v2453
      %2574 = vst [vmem:[%s334 + $0x18] sm:$0xff] %v2456
      %2575 = vst [vmem:[%s334 + $0x20] sm:$0xff] %v2461
      %2576 = vst [vmem:[%s334 + $0x28] sm:$0xff] %v2464
      %2577 = vst [vmem:[%s334 + $0x30] sm:$0xff] %v2469
      %2578 = vst [vmem:[%s334 + $0x38] sm:$0xff] %v2472
      %2579 = vst [vmem:[%s334 + $0x40] sm:$0xff] %v2477
      %2580 = vst [vmem:[%s334 + $0x48] sm:$0xff] %v2480
      %2581 = vst [vmem:[%s334 + $0x50] sm:$0xff] %v2485
      %2582 = vst [vmem:[%s334 + $0x58] sm:$0xff] %v2488
      %2583 = vst [vmem:[%s334 + $0x60] sm:$0xff] %v2493
      %2584 = vst [vmem:[%s334 + $0x68] sm:$0xff] %v2496
      %2585 = vst [vmem:[%s334 + $0x70] sm:$0xff] %v2501
      %2586 = vst [vmem:[%s334 + $0x78] sm:$0xff] %v2504
      %2587 = vst [vmem:[%s334 + $0x80] sm:$0xff] %v2509
      %2588 = vst [vmem:[%s334 + $0x88] sm:$0xff] %v2512
      %2589 = vst [vmem:[%s334 + $0x90] sm:$0xff] %v2517
      %2590 = vst [vmem:[%s334 + $0x98] sm:$0xff] %v2520
      %2591 = vst [vmem:[%s334 + $0xa0] sm:$0xff] %v2525
      %2592 = vst [vmem:[%s334 + $0xa8] sm:$0xff] %v2528
      %2593 = vst [vmem:[%s334 + $0xb0] sm:$0xff] %v2533
      %2594 = vst [vmem:[%s334 + $0xb8] sm:$0xff] %v2536
      %2595 = vst [vmem:[%s334 + $0xc0] sm:$0xff] %v2541
      %2596 = vst [vmem:[%s334 + $0xc8] sm:$0xff] %v2544
      %2597 = vst [vmem:[%s334 + $0xd0] sm:$0xff] %v2549
      %2598 = vst [vmem:[%s334 + $0xd8] sm:$0xff] %v2552
      %2599 = vst [vmem:[%s334 + $0xe0] sm:$0xff] %v2557
      %2600 = vst [vmem:[%s334 + $0xe8] sm:$0xff] %v2560
      %2601 = vst [vmem:[%s334 + $0xf0] sm:$0xff] %v2565
      %2602 = vst [vmem:[%s334 + $0xf8] sm:$0xff] %v2568
      %s2603 = smul.u32 32, %s20
      %p2604 = scmp.lt.s32.totalorder %s2603, 63
      %s2605 = scalar_select %p2604, %s2603, 63
      %s2606 = smul.addr %s2605, 8
      %s2607 = scalar_lea.vmem %s9, %s2606
      // Predicated region
      $region57: #{mymodel_forward.1} parent=55 // pred_check
        %p2608 = pneg %p232
      $region58: #{mymodel_forward.1} parent=55 // pred_check_branch
        %2610 = sbr.rel (%p2608) target = $region60
      $region59: #{mymodel_forward.1} parent=55 // pred_region
        %s2611 = smul.u32 32, %s20
      $region60: #{mymodel_forward.1} parent=55 // pred_fallthru
        _
    $region56: #{mymodel_forward.1} parent=5 // pred_fallthru
      _
    %p2612 = scmp.le.s32.totalorder 2, %s15
    // Predicated region
    $region61: #{mymodel_forward.1} parent=5 // pred_check
      %p2613 = pneg %p2612
    $region62: #{mymodel_forward.1} parent=5 // pred_check_branch
      %2615 = sbr.rel (%p2613) target = $region64
    $region63: #{mymodel_forward.1} parent=5 // pred_region
      %s2616 = ssub.s32 %s15, 2
      // Predicated region
      $region65: #{mymodel_forward.1} parent=63 // pred_check
        %p2617 = pneg %p238
      $region66: #{mymodel_forward.1} parent=63 // pred_check_branch
        %2619 = sbr.rel (%p2617) target = $region68
      $region67: #{mymodel_forward.1} parent=63 // pred_region
        %s2620 = smul.u32 32, %s21
        %p2621 = scmp.lt.s32.totalorder %s2620, 63
        %s2622 = scalar_select %p2621, %s2620, 63
        %s2623 = smul.addr %s2622, 8
        %s2624 = scalar_lea.vmem %s9, %s2623
      $region68: #{mymodel_forward.1} parent=63 // pred_fallthru
        _
    $region64: #{mymodel_forward.1} parent=5 // pred_fallthru
      _
  $region6: #{mymodel_forward.1} parent=0 // loop_footer
    %s19 = sadd.s32 1, %s15
  $region7: #{mymodel_forward.1} parent=0 // loop_footer_branch
    %14 = sbr.rel target = $region3
  $region8: #{mymodel_forward.1} parent=0 // loop_exit
    _

</llo_original>
